<compile_context>
chip_gen: v7x
topology: tpu7x:2x2x1
jax: 0.10.0
libtpu: 0.0.40
codegen_flags: <defaults>
</compile_context>

<pallas_src>
import functools
import math

import jax
import jax.numpy as jnp
from jax.experimental import pallas as pl
from jax.experimental.pallas import tpu as pltpu


# --------------------------------------------------------------------------
# helpers
# --------------------------------------------------------------------------

def _pick_tile(n, preferred):
    # Use the full extent when the dim is small or not divisible by the
    # preferred tile (keeps the BlockSpec (8,128)-or-full rule satisfied).
    # TODO(synk): zero-pad non-divisible production shapes instead of falling
    # back to a full-extent block (which could blow VMEM for huge dims).
    return preferred if (n > preferred and n % preferred == 0) else n


# --------------------------------------------------------------------------
# Kernel 1: fused projection -> roll-free RoPE -> rank contraction
# --------------------------------------------------------------------------

def _fused_qkv_kernel(x_ref, w_ref, cq_ref, sq_ref, ck_ref, sk_ref,
                      q_ref, k_ref, v_ref, acc_ref,
                      *, n_head, q_rank, rank, head_dim, offs):
    ki = pl.program_id(2)
    nk = pl.num_programs(2)

    @pl.when(ki == 0)
    def _():
        acc_ref[...] = jnp.zeros_like(acc_ref)

    # Tiled projection: accumulate x_tile @ w_tile on the MXU, f32 accumulator.
    acc_ref[...] += jnp.dot(x_ref[0], w_ref[...],
                            preferred_element_type=jnp.float32)

    @pl.when(ki == nk - 1)
    def _():
        proj = acc_ref[...]                       # (ts, F) float32
        H, Rq, R, Dh = n_head, q_rank, rank, head_dim
        Dh2 = Dh // 2

        b_q = proj[:, offs[0]:offs[1]]            # (ts, Rq*Dh) de-interleaved
        b_k = proj[:, offs[1]:offs[2]]            # (ts, R*Dh)  de-interleaved
        b_v = proj[:, offs[2]:offs[3]]            # (ts, R*Dh)  original layout
        a_q = proj[:, offs[3]:offs[4]]            # (ts, H*Rq)
        a_k = proj[:, offs[4]:offs[5]]            # (ts, H*R)
        a_v = proj[:, offs[5]:offs[6]]            # (ts, H*R)

        def rope(xb, cos_t, sin_t, r_count):
            # De-interleaved [real | imag] halves -> pure VPU FMAs, no
            # pltpu.roll, no parity select.  Tables are pre-tiled per rank.
            w2 = r_count * Dh2
            xr, xi = xb[:, :w2], xb[:, w2:]
            return xr * cos_t - xi * sin_t, xr * sin_t + xi * cos_t

        bq_r, bq_i = rope(b_q, cq_ref[...], sq_ref[...], Rq)
        bk_r, bk_i = rope(b_k, ck_ref[...], sk_ref[...], R)

        def assemble_rot(a2, br, bi, r_count, scale):
            # out[t, h, :] = scale * sum_r a2[t, h*r_count + r] * B_rot[t, r, :]
            # as unrolled 2-D FMAs; per-head blocks are concatenated once so
            # the store is a single lane-dense (ts, H*Dh) write.
            heads = []
            for h in range(H):
                acc_r = acc_i = None
                for r in range(r_count):
                    c = a2[:, h * r_count + r: h * r_count + r + 1]
                    tr = c * br[:, r * Dh2:(r + 1) * Dh2]
                    ti = c * bi[:, r * Dh2:(r + 1) * Dh2]
                    acc_r = tr if acc_r is None else acc_r + tr
                    acc_i = ti if acc_i is None else acc_i + ti
                heads.append(jnp.concatenate([acc_r, acc_i], axis=1))
            return jnp.concatenate(heads, axis=1) * scale

        def assemble_plain(a2, b2, r_count, scale):
            heads = []
            for h in range(H):
                acc = None
                for r in range(r_count):
                    c = a2[:, h * r_count + r: h * r_count + r + 1]
                    t = c * b2[:, r * Dh:(r + 1) * Dh]
                    acc = t if acc is None else acc + t
                heads.append(acc)
            return jnp.concatenate(heads, axis=1) * scale

        # softmax 1/sqrt(Dh) folded into the existing 1/q_rank scale (free).
        q_scale = 1.0 / (Rq * math.sqrt(Dh))
        kv_scale = 1.0 / R
        q_ref[0] = assemble_rot(a_q, bq_r, bq_i, Rq, q_scale).astype(q_ref.dtype)
        k_ref[0] = assemble_rot(a_k, bk_r, bk_i, R, kv_scale).astype(k_ref.dtype)
        v_ref[0] = assemble_plain(a_v, b_v, R, kv_scale).astype(v_ref.dtype)


def pallas_fused_tpa_qkv(x, w_all, cosq, sinq, cosk, sink, *,
                         n_head, q_rank, rank, head_dim,
                         ts_pref=256, tk_pref=512):
    B, S, dim = x.shape
    F = w_all.shape[1]
    ts = _pick_tile(S, ts_pref)       # token tile (sublane axis)
    tk = _pick_tile(dim, tk_pref)     # contraction tile
    Dh2 = head_dim // 2
    HD = n_head * head_dim

    sizes = [q_rank * head_dim, rank * head_dim, rank * head_dim,
             n_head * q_rank, n_head * rank, n_head * rank]
    offs = [0]
    for sz in sizes:
        offs.append(offs[-1] + sz)
    assert offs[-1] == F

    kern = functools.partial(_fused_qkv_kernel, n_head=n_head, q_rank=q_rank,
                             rank=rank, head_dim=head_dim, offs=tuple(offs))

    grid = (B, S // ts, dim // tk)
    out_shape = tuple(jax.ShapeDtypeStruct((B, S, HD), x.dtype) for _ in range(3))
    out_spec = pl.BlockSpec((1, ts, HD), lambda b, si, ki: (b, si, 0))

    bpe = x.dtype.itemsize
    cost = pl.CostEstimate(
        flops=int(2 * B * S * dim * F + 4 * B * S * HD * (q_rank + 2 * rank)),
        transcendentals=0,
        bytes_accessed=int(bpe * (x.size + w_all.size * B * (S // ts)
                                  + 3 * B * S * HD)))

    return pl.pallas_call(
        kern,
        out_shape=out_shape,
        grid=grid,
        in_specs=[
            pl.BlockSpec((1, ts, tk), lambda b, si, ki: (b, si, ki)),
            pl.BlockSpec((tk, F), lambda b, si, ki: (ki, 0)),
            pl.BlockSpec((ts, q_rank * Dh2), lambda b, si, ki: (si, 0)),
            pl.BlockSpec((ts, q_rank * Dh2), lambda b, si, ki: (si, 0)),
            pl.BlockSpec((ts, rank * Dh2), lambda b, si, ki: (si, 0)),
            pl.BlockSpec((ts, rank * Dh2), lambda b, si, ki: (si, 0)),
        ],
        out_specs=(out_spec, out_spec, out_spec),
        scratch_shapes=[pltpu.VMEM((ts, F), jnp.float32)],
        compiler_params=pltpu.CompilerParams(
            dimension_semantics=("parallel", "parallel", "arbitrary")),
        cost_estimate=cost,
    )(x, w_all, cosq, sinq, cosk, sink)


# --------------------------------------------------------------------------
# Kernel 2: flash attention on (B, S, H*Dh) slabs, heads on the lane axis
# --------------------------------------------------------------------------

def _flash_attn_kernel(q_ref, k_ref, v_ref, o_ref, m_sc, l_sc, acc_sc,
                       *, n_head, head_dim, causal, tq, tkv):
    qi = pl.program_id(1)
    ki = pl.program_id(2)
    nk = pl.num_programs(2)
    H, Dh = n_head, head_dim

    @pl.when(ki == 0)
    def _():
        m_sc[...] = jnp.full_like(m_sc, -jnp.inf)
        l_sc[...] = jnp.zeros_like(l_sc)
        acc_sc[...] = jnp.zeros_like(acc_sc)

    q_start = qi * tq
    k_start = ki * tkv

    def update(masked):
        q = q_ref[0]                              # (tq, H*Dh)
        k = k_ref[0]
        v = v_ref[0]
        if masked:
            row = q_start + jax.lax.broadcasted_iota(jnp.int32, (tq, tkv), 0)
            col = k_start + jax.lax.broadcasted_iota(jnp.int32, (tq, tkv), 1)
            neg = jnp.where(row >= col, 0.0, -jnp.inf)   # shared by all heads
        m_all, l_all, acc_all = m_sc[...], l_sc[...], acc_sc[...]
        new_m, new_l, new_acc = [], [], []
        for h in range(H):
            sl = slice(h * Dh, (h + 1) * Dh)
            # q already carries 1/sqrt(Dh); contract dim 1 of both (no transpose).
            s = jax.lax.dot_general(q[:, sl], k[:, sl],
                                    (((1,), (1,)), ((), ())),
                                    preferred_element_type=jnp.float32)
            if masked:
                s = s + neg
            m_prev = m_all[:, h:h + 1]
            m_new = jnp.maximum(m_prev, jnp.max(s, axis=-1, keepdims=True))
            alpha = jnp.exp(m_prev - m_new)
            p = jnp.exp(s - m_new)
            new_m.append(m_new)
            new_l.append(alpha * l_all[:, h:h + 1]
                         + jnp.sum(p, axis=-1, keepdims=True))
            new_acc.append(alpha * acc_all[:, sl]
                           + jnp.dot(p.astype(v.dtype), v[:, sl],
                                     preferred_element_type=jnp.float32))
        # full-width scratch writes (lane-dense), not per-column stores
        m_sc[...] = jnp.concatenate(new_m, axis=1)
        l_sc[...] = jnp.concatenate(new_l, axis=1)
        acc_sc[...] = jnp.concatenate(new_acc, axis=1)

    if causal:
        q_end = q_start + tq - 1
        fully_visible = (k_start + tkv - 1) <= q_start
        partial = jnp.logical_and(k_start <= q_end,
                                  jnp.logical_not(fully_visible))
        # Fully-visible tiles skip the iota/mask work; fully-masked tiles skip
        # compute entirely (their K/V DMA is already skipped by the clamped
        # index_map in the wrapper).
        pl.when(fully_visible)(lambda: update(False))
        pl.when(partial)(lambda: update(True))
    else:
        update(False)

    @pl.when(ki == nk - 1)
    def _():
        l = l_sc[...]                             # (tq, H)
        r0 = pl.reciprocal(l, approx=True)        # EUP
        inv = r0 * (2.0 - l * r0)                 # one Newton step -> ~f32 exact
        acc = acc_sc[...]                         # (tq, H*Dh)
        outs = [acc[:, h * Dh:(h + 1) * Dh] * inv[:, h:h + 1] for h in range(H)]
        o_ref[0] = jnp.concatenate(outs, axis=1).astype(o_ref.dtype)


def pallas_flash_attention(q, k, v, *, n_head, head_dim, causal=True,
                           tq_pref=256, tkv_pref=256):
    B, S, HD = q.shape
    assert HD == n_head * head_dim
    tq = _pick_tile(S, tq_pref)
    tkv = _pick_tile(S, tkv_pref)

    def q_index(b, qi, ki):
        return (b, qi, 0)

    if causal:
        def kv_index(b, qi, ki):
            # Clamp to the last kv tile this q tile can see: past the diagonal
            # the block index repeats and Pallas skips the (useless) DMA.
            last = (qi * tq + tq - 1) // tkv
            return (b, jnp.minimum(ki, last), 0)
    else:
        def kv_index(b, qi, ki):
            return (b, ki, 0)

    kern = functools.partial(_flash_attn_kernel, n_head=n_head,
                             head_dim=head_dim, causal=causal, tq=tq, tkv=tkv)

    bpe = q.dtype.itemsize
    causal_div = 2 if causal else 1
    cost = pl.CostEstimate(
        flops=int(4 * B * n_head * S * S * head_dim) // causal_div,
        transcendentals=int(B * n_head * S * S) // causal_div,
        bytes_accessed=int(bpe * (q.size + k.size + v.size + B * S * HD)))

    return pl.pallas_call(
        kern,
        out_shape=jax.ShapeDtypeStruct((B, S, HD), q.dtype),
        grid=(B, S // tq, S // tkv),
        in_specs=[
            pl.BlockSpec((1, tq, HD), q_index),
            pl.BlockSpec((1, tkv, HD), kv_index),
            pl.BlockSpec((1, tkv, HD), kv_index),
        ],
        out_specs=pl.BlockSpec((1, tq, HD), q_index),
        scratch_shapes=[pltpu.VMEM((tq, n_head), jnp.float32),
                        pltpu.VMEM((tq, n_head), jnp.float32),
                        pltpu.VMEM((tq, HD), jnp.float32)],
        compiler_params=pltpu.CompilerParams(
            dimension_semantics=("parallel", "parallel", "arbitrary")),
        cost_estimate=cost,
    )(q, k, v)


# --------------------------------------------------------------------------
# glue (plain JAX, built once outside the forward)
# --------------------------------------------------------------------------

def precompute_rope(head_dim, seqlen, theta=500000.0):
    freqs = 1.0 / (theta ** (jnp.arange(0, head_dim, 2, dtype=jnp.float32)
                             / head_dim))
    ang = jnp.outer(jnp.arange(seqlen, dtype=jnp.float32), freqs)  # (S, Dh//2)
    return jnp.cos(ang), jnp.sin(ang)


def build_rope_tables(cos, sin, r_count):
    # (S, Dh/2) -> (S, r_count*Dh/2), matching the de-interleaved B layout.
    return jnp.tile(cos, (1, r_count)), jnp.tile(sin, (1, r_count))


def deinterleave_wb(w, r_count, head_dim):
    # Permute output columns of W_B so the layout is [all real | all imag]
    # (rank-major inside each half).  Q and K use the same permutation, so
    # attention scores -- and hence the module output -- are unchanged.
    dim = w.shape[0]
    w4 = w.reshape(dim, r_count, head_dim // 2, 2)
    real = w4[..., 0].reshape(dim, r_count * (head_dim // 2))
    imag = w4[..., 1].reshape(dim, r_count * (head_dim // 2))
    return jnp.concatenate([real, imag], axis=1)


def build_fused_weight(params, n_head, q_rank, rank, head_dim):
    # Column order: [B_q | B_k | B_v | A_q | A_k | A_v]; B_q / B_k columns are
    # de-interleaved so in-kernel RoPE needs no roll / parity select.
    return jnp.concatenate(
        [deinterleave_wb(params["W_B_q"], q_rank, head_dim),
         deinterleave_wb(params["W_B_k"], rank, head_dim),
         params["W_B_v"], params["W_A_q"], params["W_A_k"], params["W_A_v"]],
        axis=1)


def init_tpa_params(key, dim, n_head, q_rank, rank, head_dim):
    ks = jax.random.split(key, 6)

    def xavier(k, out_features):
        bound = math.sqrt(6.0 / (dim + out_features))
        return jax.random.uniform(k, (dim, out_features), jnp.float32,
                                  -bound, bound)

    return {
        "W_A_q": xavier(ks[0], n_head * q_rank),
        "W_A_k": xavier(ks[1], n_head * rank),
        "W_A_v": xavier(ks[2], n_head * rank),
        "W_B_q": xavier(ks[3], q_rank * head_dim),
        "W_B_k": xavier(ks[4], rank * head_dim),
        "W_B_v": xavier(ks[5], rank * head_dim),
    }


def tpa_forward(x, start_pos, w_all, rope_tables, n_head, q_rank, rank,
                head_dim, causal=True):
    # TODO(synk): KV-cache decode path (start_pos > 0) and arbitrary additive
    # masks are not implemented; prefill with an in-kernel causal mask only.
    assert start_pos == 0
    cosq, sinq, cosk, sink = rope_tables
    qf, kf, vf = pallas_fused_tpa_qkv(
        x, w_all, cosq, sinq, cosk, sink,
        n_head=n_head, q_rank=q_rank, rank=rank, head_dim=head_dim)
    # Q/K/V stay (B, S, H*Dh): no HBM transpose between the two kernels, and
    # the attention output already has the module's (B, S, H*Dh) layout.
    return pallas_flash_attention(qf, kf, vf, n_head=n_head,
                                  head_dim=head_dim, causal=causal)


# --------------------------------------------------------------------------
# pure-JAX reference (original interleaved RoPE / layouts)
# --------------------------------------------------------------------------

def apply_rotary_ref(xb, cos, sin):
    shp = xb.shape
    xf = xb.astype(jnp.float32).reshape(*shp[:-1], shp[-1] // 2, 2)
    xr, xi = xf[..., 0], xf[..., 1]
    c = cos[None, :, None, :]
    s = sin[None, :, None, :]
    out = jnp.stack([xr * c - xi * s, xr * s + xi * c], axis=-1).reshape(shp)
    return out.astype(xb.dtype)


def tpa_reference(x, cos, sin, params, n_head, q_rank, rank, head_dim):
    with jax.default_matmul_precision("highest"):
        B, S, _ = x.shape
        A_q = (x @ params["W_A_q"]).reshape(B, S, n_head, q_rank)
        A_k = (x @ params["W_A_k"]).reshape(B, S, n_head, rank)
        A_v = (x @ params["W_A_v"]).reshape(B, S, n_head, rank)
        B_q = (x @ params["W_B_q"]).reshape(B, S, q_rank, head_dim)
        B_k = (x @ params["W_B_k"]).reshape(B, S, rank, head_dim)
        B_v = (x @ params["W_B_v"]).reshape(B, S, rank, head_dim)
        B_q = apply_rotary_ref(B_q, cos, sin)
        B_k = apply_rotary_ref(B_k, cos, sin)
        q = jnp.einsum("bshr,bsrd->bshd", A_q, B_q) / q_rank
        k = jnp.einsum("bshr,bsrd->bshd", A_k, B_k) / rank
        v = jnp.einsum("bshr,bsrd->bshd", A_v, B_v) / rank
        q, k, v = (t.transpose(0, 2, 1, 3) for t in (q, k, v))
        mask = jnp.triu(jnp.full((S, S), -1e30, jnp.float32), k=1)
        scores = jnp.einsum("bhsd,bhtd->bhst", q, k) / math.sqrt(head_dim) + mask
        p = jax.nn.softmax(scores.astype(jnp.float32), axis=-1)
        out = jnp.einsum("bhst,bhtd->bhsd", p, v)
    return out.transpose(0, 2, 1, 3).reshape(B, S, n_head * head_dim)


# --------------------------------------------------------------------------
# main
# --------------------------------------------------------------------------

if __name__ == "__main__":
    B, S, dim = 2, 8, 64
    n_head, head_dim = 4, 16
    q_rank, rank = 4, 2
    theta = 500000.0

    key = jax.random.PRNGKey(0)
    kx, kp = jax.random.split(key)
    x = jax.random.normal(kx, (B, S, dim), jnp.float32)
    params = init_tpa_params(kp, dim, n_head, q_rank, rank, head_dim)

    # Fused weight (B-factor columns de-interleaved for roll-free RoPE) and
    # half-width rope tables, built once outside the forward.
    w_all = build_fused_weight(params, n_head, q_rank, rank, head_dim)
    cos, sin = precompute_rope(head_dim, S, theta)
    cosq, sinq = build_rope_tables(cos, sin, q_rank)
    cosk, sink = build_rope_tables(cos, sin, rank)

    out = tpa_forward(x, 0, w_all, (cosq, sinq, cosk, sink),
                      n_head, q_rank, rank, head_dim, causal=True)
    out = jax.block_until_ready(out)

    ref = tpa_reference(x, cos, sin, params, n_head, q_rank, rank, head_dim)
    assert out.shape == (B, S, n_head * head_dim)
    err = float(jnp.max(jnp.abs(out - ref)))
    assert jnp.allclose(out, ref, atol=2e-3, rtol=2e-3), f"max diff {err}"
    print("KERNEL_OK")
</pallas_src>

<mosaic_0001>
module attributes {stable_mosaic.version = 11 : i64} {
  func.func @_fused_qkv_kernel(%arg0: i32, %arg1: i32, %arg2: i32, %arg3: memref<1x8x64xf32, #tpu.memory_space<vmem>>, %arg4: memref<64x160xf32, #tpu.memory_space<vmem>>, %arg5: memref<8x32xf32, #tpu.memory_space<vmem>>, %arg6: memref<8x32xf32, #tpu.memory_space<vmem>>, %arg7: memref<8x16xf32, #tpu.memory_space<vmem>>, %arg8: memref<8x16xf32, #tpu.memory_space<vmem>>, %arg9: memref<1x8x64xf32, #tpu.memory_space<vmem>>, %arg10: memref<1x8x64xf32, #tpu.memory_space<vmem>>, %arg11: memref<1x8x64xf32, #tpu.memory_space<vmem>>, %arg12: memref<8x160xf32, #tpu.memory_space<vmem>>) attributes {dimension_semantics = [#tpu.dimension_semantics<parallel>, #tpu.dimension_semantics<parallel>, #tpu.dimension_semantics<arbitrary>], iteration_bounds = array<i64: 2, 1, 1>, scalar_prefetch = 0 : i64, scratch_operands = 1 : i64, tpu.core_type = #tpu.core_type<tc>, window_params = [{transform_indices = @transform_0, window_bounds = array<i64: 1, 8, 64>}, {transform_indices = @transform_1, window_bounds = array<i64: 64, 160>}, {transform_indices = @transform_2, window_bounds = array<i64: 8, 32>}, {transform_indices = @transform_3, window_bounds = array<i64: 8, 32>}, {transform_indices = @transform_4, window_bounds = array<i64: 8, 16>}, {transform_indices = @transform_5, window_bounds = array<i64: 8, 16>}, {transform_indices = @transform_6, window_bounds = array<i64: 1, 8, 64>}, {transform_indices = @transform_7, window_bounds = array<i64: 1, 8, 64>}, {transform_indices = @transform_8, window_bounds = array<i64: 1, 8, 64>}]} {
    %c0_i32 = arith.constant 0 : i32
    %0 = arith.cmpi eq, %arg2, %c0_i32 : i32
    %1 = arith.extui %0 : i1 to i32
    %c0_i32_0 = arith.constant 0 : i32
    %2 = arith.cmpi ne, %1, %c0_i32_0 : i32
    scf.if %2 {
      %cst_11 = arith.constant 0.000000e+00 : f32
      %13 = vector.broadcast %cst_11 : f32 to vector<8x160xf32>
      %c0_12 = arith.constant 0 : index
      %c0_13 = arith.constant 0 : index
      %14 = vector.load %arg12[%c0_12, %c0_13] : memref<8x160xf32, #tpu.memory_space<vmem>>, vector<8x160xf32>
      tpu.vector_store %arg12[%c0_12, %c0_13], %13 {strides = array<i32>} : memref<8x160xf32, #tpu.memory_space<vmem>>, vector<8x160xf32>,
    } else {
    }
    %c0 = arith.constant 0 : index
    %c0_1 = arith.constant 0 : index
    %3 = vector.load %arg12[%c0, %c0_1] : memref<8x160xf32, #tpu.memory_space<vmem>>, vector<8x160xf32>
    %c0_2 = arith.constant 0 : index
    %c0_3 = arith.constant 0 : index
    %c0_4 = arith.constant 0 : index
    %4 = vector.load %arg3[%c0_2, %c0_3, %c0_4] : memref<1x8x64xf32, #tpu.memory_space<vmem>>, vector<1x8x64xf32>
    %5 = vector.shape_cast %4 : vector<1x8x64xf32> to vector<8x64xf32>
    %c0_5 = arith.constant 0 : index
    %c0_6 = arith.constant 0 : index
    %6 = vector.load %arg4[%c0_5, %c0_6] : memref<64x160xf32, #tpu.memory_space<vmem>>, vector<64x160xf32>
    %cst = arith.constant dense<0.000000e+00> : vector<8x160xf32>
    %7 = tpu.matmul %5, %6, %cst {dimension_numbers = #tpu.dot_dimension_numbers<[1], [0], [0], [1], [0, 0, 1, 1], [], []>} : vector<8x64xf32>, vector<64x160xf32>, vector<8x160xf32> -> vector<8x160xf32>
    %8 = arith.addf %3, %7 : vector<8x160xf32>
    %c0_7 = arith.constant 0 : index
    %c0_8 = arith.constant 0 : index
    %9 = vector.load %arg12[%c0_7, %c0_8] : memref<8x160xf32, #tpu.memory_space<vmem>>, vector<8x160xf32>
    tpu.vector_store %arg12[%c0_7, %c0_8], %8 {strides = array<i32>} : memref<8x160xf32, #tpu.memory_space<vmem>>, vector<8x160xf32>,
    %c0_i32_9 = arith.constant 0 : i32
    %10 = arith.cmpi eq, %arg2, %c0_i32_9 : i32
    %11 = arith.extui %10 : i1 to i32
    %c0_i32_10 = arith.constant 0 : i32
    %12 = arith.cmpi ne, %11, %c0_i32_10 : i32
    scf.if %12 {
      %c0_11 = arith.constant 0 : index
      %c0_12 = arith.constant 0 : index
      %13 = vector.load %arg12[%c0_11, %c0_12] : memref<8x160xf32, #tpu.memory_space<vmem>>, vector<8x160xf32>
      %14 = vector.extract_strided_slice %13 {offsets = [0, 0], sizes = [8, 64], strides = [1, 1]} : vector<8x160xf32> to vector<8x64xf32>
      %15 = vector.extract_strided_slice %13 {offsets = [0, 64], sizes = [8, 32], strides = [1, 1]} : vector<8x160xf32> to vector<8x32xf32>
      %16 = vector.extract_strided_slice %13 {offsets = [0, 96], sizes = [8, 32], strides = [1, 1]} : vector<8x160xf32> to vector<8x32xf32>
      %17 = vector.extract_strided_slice %13 {offsets = [0, 128], sizes = [8, 16], strides = [1, 1]} : vector<8x160xf32> to vector<8x16xf32>
      %18 = vector.extract_strided_slice %13 {offsets = [0, 144], sizes = [8, 8], strides = [1, 1]} : vector<8x160xf32> to vector<8x8xf32>
      %19 = vector.extract_strided_slice %13 {offsets = [0, 152], sizes = [8, 8], strides = [1, 1]} : vector<8x160xf32> to vector<8x8xf32>
      %c0_13 = arith.constant 0 : index
      %c0_14 = arith.constant 0 : index
      %20 = vector.load %arg5[%c0_13, %c0_14] : memref<8x32xf32, #tpu.memory_space<vmem>>, vector<8x32xf32>
      %c0_15 = arith.constant 0 : index
      %c0_16 = arith.constant 0 : index
      %21 = vector.load %arg6[%c0_15, %c0_16] : memref<8x32xf32, #tpu.memory_space<vmem>>, vector<8x32xf32>
      %22 = vector.extract_strided_slice %14 {offsets = [0, 0], sizes = [8, 32], strides = [1, 1]} : vector<8x64xf32> to vector<8x32xf32>
      %23 = vector.extract_strided_slice %14 {offsets = [0, 32], sizes = [8, 32], strides = [1, 1]} : vector<8x64xf32> to vector<8x32xf32>
      %24 = arith.mulf %22, %20 : vector<8x32xf32>
      %25 = arith.mulf %23, %21 : vector<8x32xf32>
      %26 = arith.subf %24, %25 : vector<8x32xf32>
      %27 = arith.mulf %22, %21 : vector<8x32xf32>
      %28 = arith.mulf %23, %20 : vector<8x32xf32>
      %29 = arith.addf %27, %28 : vector<8x32xf32>
      %c0_17 = arith.constant 0 : index
      %c0_18 = arith.constant 0 : index
      %30 = vector.load %arg7[%c0_17, %c0_18] : memref<8x16xf32, #tpu.memory_space<vmem>>, vector<8x16xf32>
      %c0_19 = arith.constant 0 : index
      %c0_20 = arith.constant 0 : index
      %31 = vector.load %arg8[%c0_19, %c0_20] : memref<8x16xf32, #tpu.memory_space<vmem>>, vector<8x16xf32>
      %32 = vector.extract_strided_slice %15 {offsets = [0, 0], sizes = [8, 16], strides = [1, 1]} : vector<8x32xf32> to vector<8x16xf32>
      %33 = vector.extract_strided_slice %15 {offsets = [0, 16], sizes = [8, 16], strides = [1, 1]} : vector<8x32xf32> to vector<8x16xf32>
      %34 = arith.mulf %32, %30 : vector<8x16xf32>
      %35 = arith.mulf %33, %31 : vector<8x16xf32>
      %36 = arith.subf %34, %35 : vector<8x16xf32>
      %37 = arith.mulf %32, %31 : vector<8x16xf32>
      %38 = arith.mulf %33, %30 : vector<8x16xf32>
      %39 = arith.addf %37, %38 : vector<8x16xf32>
      %40 = vector.extract_strided_slice %17 {offsets = [0, 0], sizes = [8, 1], strides = [1, 1]} : vector<8x16xf32> to vector<8x1xf32>
      %41 = vector.extract_strided_slice %26 {offsets = [0, 0], sizes = [8, 8], strides = [1, 1]} : vector<8x32xf32> to vector<8x8xf32>
      %42 = vector.broadcast %40 : vector<8x1xf32> to vector<8x8xf32>
      %43 = arith.mulf %42, %41 : vector<8x8xf32>
      %44 = vector.extract_strided_slice %29 {offsets = [0, 0], sizes = [8, 8], strides = [1, 1]} : vector<8x32xf32> to vector<8x8xf32>
      %45 = vector.broadcast %40 : vector<8x1xf32> to vector<8x8xf32>
      %46 = arith.mulf %45, %44 : vector<8x8xf32>
      %47 = vector.extract_strided_slice %17 {offsets = [0, 1], sizes = [8, 1], strides = [1, 1]} : vector<8x16xf32> to vector<8x1xf32>
      %48 = vector.extract_strided_slice %26 {offsets = [0, 8], sizes = [8, 8], strides = [1, 1]} : vector<8x32xf32> to vector<8x8xf32>
      %49 = vector.broadcast %47 : vector<8x1xf32> to vector<8x8xf32>
      %50 = arith.mulf %49, %48 : vector<8x8xf32>
      %51 = vector.extract_strided_slice %29 {offsets = [0, 8], sizes = [8, 8], strides = [1, 1]} : vector<8x32xf32> to vector<8x8xf32>
      %52 = vector.broadcast %47 : vector<8x1xf32> to vector<8x8xf32>
      %53 = arith.mulf %52, %51 : vector<8x8xf32>
      %54 = arith.addf %43, %50 : vector<8x8xf32>
      %55 = arith.addf %46, %53 : vector<8x8xf32>
      %56 = vector.extract_strided_slice %17 {offsets = [0, 2], sizes = [8, 1], strides = [1, 1]} : vector<8x16xf32> to vector<8x1xf32>
      %57 = vector.extract_strided_slice %26 {offsets = [0, 16], sizes = [8, 8], strides = [1, 1]} : vector<8x32xf32> to vector<8x8xf32>
      %58 = vector.broadcast %56 : vector<8x1xf32> to vector<8x8xf32>
      %59 = arith.mulf %58, %57 : vector<8x8xf32>
      %60 = vector.extract_strided_slice %29 {offsets = [0, 16], sizes = [8, 8], strides = [1, 1]} : vector<8x32xf32> to vector<8x8xf32>
      %61 = vector.broadcast %56 : vector<8x1xf32> to vector<8x8xf32>
      %62 = arith.mulf %61, %60 : vector<8x8xf32>
      %63 = arith.addf %54, %59 : vector<8x8xf32>
      %64 = arith.addf %55, %62 : vector<8x8xf32>
      %65 = vector.extract_strided_slice %17 {offsets = [0, 3], sizes = [8, 1], strides = [1, 1]} : vector<8x16xf32> to vector<8x1xf32>
      %66 = vector.extract_strided_slice %26 {offsets = [0, 24], sizes = [8, 8], strides = [1, 1]} : vector<8x32xf32> to vector<8x8xf32>
      %67 = vector.broadcast %65 : vector<8x1xf32> to vector<8x8xf32>
      %68 = arith.mulf %67, %66 : vector<8x8xf32>
      %69 = vector.extract_strided_slice %29 {offsets = [0, 24], sizes = [8, 8], strides = [1, 1]} : vector<8x32xf32> to vector<8x8xf32>
      %70 = vector.broadcast %65 : vector<8x1xf32> to vector<8x8xf32>
      %71 = arith.mulf %70, %69 : vector<8x8xf32>
      %72 = arith.addf %63, %68 : vector<8x8xf32>
      %73 = arith.addf %64, %71 : vector<8x8xf32>
      %74 = tpu.concatenate %72, %73 in 1 : vector<8x8xf32>, vector<8x8xf32> -> vector<8x16xf32>
      %75 = vector.extract_strided_slice %17 {offsets = [0, 4], sizes = [8, 1], strides = [1, 1]} : vector<8x16xf32> to vector<8x1xf32>
      %76 = vector.extract_strided_slice %26 {offsets = [0, 0], sizes = [8, 8], strides = [1, 1]} : vector<8x32xf32> to vector<8x8xf32>
      %77 = vector.broadcast %75 : vector<8x1xf32> to vector<8x8xf32>
      %78 = arith.mulf %77, %76 : vector<8x8xf32>
      %79 = vector.extract_strided_slice %29 {offsets = [0, 0], sizes = [8, 8], strides = [1, 1]} : vector<8x32xf32> to vector<8x8xf32>
      %80 = vector.broadcast %75 : vector<8x1xf32> to vector<8x8xf32>
      %81 = arith.mulf %80, %79 : vector<8x8xf32>
      %82 = vector.extract_strided_slice %17 {offsets = [0, 5], sizes = [8, 1], strides = [1, 1]} : vector<8x16xf32> to vector<8x1xf32>
      %83 = vector.extract_strided_slice %26 {offsets = [0, 8], sizes = [8, 8], strides = [1, 1]} : vector<8x32xf32> to vector<8x8xf32>
      %84 = vector.broadcast %82 : vector<8x1xf32> to vector<8x8xf32>
      %85 = arith.mulf %84, %83 : vector<8x8xf32>
      %86 = vector.extract_strided_slice %29 {offsets = [0, 8], sizes = [8, 8], strides = [1, 1]} : vector<8x32xf32> to vector<8x8xf32>
      %87 = vector.broadcast %82 : vector<8x1xf32> to vector<8x8xf32>
      %88 = arith.mulf %87, %86 : vector<8x8xf32>
      %89 = arith.addf %78, %85 : vector<8x8xf32>
      %90 = arith.addf %81, %88 : vector<8x8xf32>
      %91 = vector.extract_strided_slice %17 {offsets = [0, 6], sizes = [8, 1], strides = [1, 1]} : vector<8x16xf32> to vector<8x1xf32>
      %92 = vector.extract_strided_slice %26 {offsets = [0, 16], sizes = [8, 8], strides = [1, 1]} : vector<8x32xf32> to vector<8x8xf32>
      %93 = vector.broadcast %91 : vector<8x1xf32> to vector<8x8xf32>
      %94 = arith.mulf %93, %92 : vector<8x8xf32>
      %95 = vector.extract_strided_slice %29 {offsets = [0, 16], sizes = [8, 8], strides = [1, 1]} : vector<8x32xf32> to vector<8x8xf32>
      %96 = vector.broadcast %91 : vector<8x1xf32> to vector<8x8xf32>
      %97 = arith.mulf %96, %95 : vector<8x8xf32>
      %98 = arith.addf %89, %94 : vector<8x8xf32>
      %99 = arith.addf %90, %97 : vector<8x8xf32>
      %100 = vector.extract_strided_slice %17 {offsets = [0, 7], sizes = [8, 1], strides = [1, 1]} : vector<8x16xf32> to vector<8x1xf32>
      %101 = vector.extract_strided_slice %26 {offsets = [0, 24], sizes = [8, 8], strides = [1, 1]} : vector<8x32xf32> to vector<8x8xf32>
      %102 = vector.broadcast %100 : vector<8x1xf32> to vector<8x8xf32>
      %103 = arith.mulf %102, %101 : vector<8x8xf32>
      %104 = vector.extract_strided_slice %29 {offsets = [0, 24], sizes = [8, 8], strides = [1, 1]} : vector<8x32xf32> to vector<8x8xf32>
      %105 = vector.broadcast %100 : vector<8x1xf32> to vector<8x8xf32>
      %106 = arith.mulf %105, %104 : vector<8x8xf32>
      %107 = arith.addf %98, %103 : vector<8x8xf32>
      %108 = arith.addf %99, %106 : vector<8x8xf32>
      %109 = tpu.concatenate %107, %108 in 1 : vector<8x8xf32>, vector<8x8xf32> -> vector<8x16xf32>
      %110 = vector.extract_strided_slice %17 {offsets = [0, 8], sizes = [8, 1], strides = [1, 1]} : vector<8x16xf32> to vector<8x1xf32>
      %111 = vector.extract_strided_slice %26 {offsets = [0, 0], sizes = [8, 8], strides = [1, 1]} : vector<8x32xf32> to vector<8x8xf32>
      %112 = vector.broadcast %110 : vector<8x1xf32> to vector<8x8xf32>
      %113 = arith.mulf %112, %111 : vector<8x8xf32>
      %114 = vector.extract_strided_slice %29 {offsets = [0, 0], sizes = [8, 8], strides = [1, 1]} : vector<8x32xf32> to vector<8x8xf32>
      %115 = vector.broadcast %110 : vector<8x1xf32> to vector<8x8xf32>
      %116 = arith.mulf %115, %114 : vector<8x8xf32>
      %117 = vector.extract_strided_slice %17 {offsets = [0, 9], sizes = [8, 1], strides = [1, 1]} : vector<8x16xf32> to vector<8x1xf32>
      %118 = vector.extract_strided_slice %26 {offsets = [0, 8], sizes = [8, 8], strides = [1, 1]} : vector<8x32xf32> to vector<8x8xf32>
      %119 = vector.broadcast %117 : vector<8x1xf32> to vector<8x8xf32>
      %120 = arith.mulf %119, %118 : vector<8x8xf32>
      %121 = vector.extract_strided_slice %29 {offsets = [0, 8], sizes = [8, 8], strides = [1, 1]} : vector<8x32xf32> to vector<8x8xf32>
      %122 = vector.broadcast %117 : vector<8x1xf32> to vector<8x8xf32>
      %123 = arith.mulf %122, %121 : vector<8x8xf32>
      %124 = arith.addf %113, %120 : vector<8x8xf32>
      %125 = arith.addf %116, %123 : vector<8x8xf32>
      %126 = vector.extract_strided_slice %17 {offsets = [0, 10], sizes = [8, 1], strides = [1, 1]} : vector<8x16xf32> to vector<8x1xf32>
      %127 = vector.extract_strided_slice %26 {offsets = [0, 16], sizes = [8, 8], strides = [1, 1]} : vector<8x32xf32> to vector<8x8xf32>
      %128 = vector.broadcast %126 : vector<8x1xf32> to vector<8x8xf32>
      %129 = arith.mulf %128, %127 : vector<8x8xf32>
      %130 = vector.extract_strided_slice %29 {offsets = [0, 16], sizes = [8, 8], strides = [1, 1]} : vector<8x32xf32> to vector<8x8xf32>
      %131 = vector.broadcast %126 : vector<8x1xf32> to vector<8x8xf32>
      %132 = arith.mulf %131, %130 : vector<8x8xf32>
      %133 = arith.addf %124, %129 : vector<8x8xf32>
      %134 = arith.addf %125, %132 : vector<8x8xf32>
      %135 = vector.extract_strided_slice %17 {offsets = [0, 11], sizes = [8, 1], strides = [1, 1]} : vector<8x16xf32> to vector<8x1xf32>
      %136 = vector.extract_strided_slice %26 {offsets = [0, 24], sizes = [8, 8], strides = [1, 1]} : vector<8x32xf32> to vector<8x8xf32>
      %137 = vector.broadcast %135 : vector<8x1xf32> to vector<8x8xf32>
      %138 = arith.mulf %137, %136 : vector<8x8xf32>
      %139 = vector.extract_strided_slice %29 {offsets = [0, 24], sizes = [8, 8], strides = [1, 1]} : vector<8x32xf32> to vector<8x8xf32>
      %140 = vector.broadcast %135 : vector<8x1xf32> to vector<8x8xf32>
      %141 = arith.mulf %140, %139 : vector<8x8xf32>
      %142 = arith.addf %133, %138 : vector<8x8xf32>
      %143 = arith.addf %134, %141 : vector<8x8xf32>
      %144 = tpu.concatenate %142, %143 in 1 : vector<8x8xf32>, vector<8x8xf32> -> vector<8x16xf32>
      %145 = vector.extract_strided_slice %17 {offsets = [0, 12], sizes = [8, 1], strides = [1, 1]} : vector<8x16xf32> to vector<8x1xf32>
      %146 = vector.extract_strided_slice %26 {offsets = [0, 0], sizes = [8, 8], strides = [1, 1]} : vector<8x32xf32> to vector<8x8xf32>
      %147 = vector.broadcast %145 : vector<8x1xf32> to vector<8x8xf32>
      %148 = arith.mulf %147, %146 : vector<8x8xf32>
      %149 = vector.extract_strided_slice %29 {offsets = [0, 0], sizes = [8, 8], strides = [1, 1]} : vector<8x32xf32> to vector<8x8xf32>
      %150 = vector.broadcast %145 : vector<8x1xf32> to vector<8x8xf32>
      %151 = arith.mulf %150, %149 : vector<8x8xf32>
      %152 = vector.extract_strided_slice %17 {offsets = [0, 13], sizes = [8, 1], strides = [1, 1]} : vector<8x16xf32> to vector<8x1xf32>
      %153 = vector.extract_strided_slice %26 {offsets = [0, 8], sizes = [8, 8], strides = [1, 1]} : vector<8x32xf32> to vector<8x8xf32>
      %154 = vector.broadcast %152 : vector<8x1xf32> to vector<8x8xf32>
      %155 = arith.mulf %154, %153 : vector<8x8xf32>
      %156 = vector.extract_strided_slice %29 {offsets = [0, 8], sizes = [8, 8], strides = [1, 1]} : vector<8x32xf32> to vector<8x8xf32>
      %157 = vector.broadcast %152 : vector<8x1xf32> to vector<8x8xf32>
      %158 = arith.mulf %157, %156 : vector<8x8xf32>
      %159 = arith.addf %148, %155 : vector<8x8xf32>
      %160 = arith.addf %151, %158 : vector<8x8xf32>
      %161 = vector.extract_strided_slice %17 {offsets = [0, 14], sizes = [8, 1], strides = [1, 1]} : vector<8x16xf32> to vector<8x1xf32>
      %162 = vector.extract_strided_slice %26 {offsets = [0, 16], sizes = [8, 8], strides = [1, 1]} : vector<8x32xf32> to vector<8x8xf32>
      %163 = vector.broadcast %161 : vector<8x1xf32> to vector<8x8xf32>
      %164 = arith.mulf %163, %162 : vector<8x8xf32>
      %165 = vector.extract_strided_slice %29 {offsets = [0, 16], sizes = [8, 8], strides = [1, 1]} : vector<8x32xf32> to vector<8x8xf32>
      %166 = vector.broadcast %161 : vector<8x1xf32> to vector<8x8xf32>
      %167 = arith.mulf %166, %165 : vector<8x8xf32>
      %168 = arith.addf %159, %164 : vector<8x8xf32>
      %169 = arith.addf %160, %167 : vector<8x8xf32>
      %170 = vector.extract_strided_slice %17 {offsets = [0, 15], sizes = [8, 1], strides = [1, 1]} : vector<8x16xf32> to vector<8x1xf32>
      %171 = vector.extract_strided_slice %26 {offsets = [0, 24], sizes = [8, 8], strides = [1, 1]} : vector<8x32xf32> to vector<8x8xf32>
      %172 = vector.broadcast %170 : vector<8x1xf32> to vector<8x8xf32>
      %173 = arith.mulf %172, %171 : vector<8x8xf32>
      %174 = vector.extract_strided_slice %29 {offsets = [0, 24], sizes = [8, 8], strides = [1, 1]} : vector<8x32xf32> to vector<8x8xf32>
      %175 = vector.broadcast %170 : vector<8x1xf32> to vector<8x8xf32>
      %176 = arith.mulf %175, %174 : vector<8x8xf32>
      %177 = arith.addf %168, %173 : vector<8x8xf32>
      %178 = arith.addf %169, %176 : vector<8x8xf32>
      %179 = tpu.concatenate %177, %178 in 1 : vector<8x8xf32>, vector<8x8xf32> -> vector<8x16xf32>
      %180 = tpu.concatenate %74, %109, %144, %179 in 1 : vector<8x16xf32>, vector<8x16xf32>, vector<8x16xf32>, vector<8x16xf32> -> vector<8x64xf32>
      %cst_21 = arith.constant 6.250000e-02 : f32
      %181 = vector.broadcast %cst_21 : f32 to vector<8x64xf32>
      %182 = arith.mulf %180, %181 : vector<8x64xf32>
      %c0_22 = arith.constant 0 : index
      %c0_23 = arith.constant 0 : index
      %c0_24 = arith.constant 0 : index
      %183 = vector.load %arg9[%c0_22, %c0_23, %c0_24] : memref<1x8x64xf32, #tpu.memory_space<vmem>>, vector<1x8x64xf32>
      %184 = vector.shape_cast %183 : vector<1x8x64xf32> to vector<8x64xf32>
      %185 = vector.shape_cast %182 : vector<8x64xf32> to vector<1x8x64xf32>
      tpu.vector_store %arg9[%c0_22, %c0_23, %c0_24], %185 {strides = array<i32>} : memref<1x8x64xf32, #tpu.memory_space<vmem>>, vector<1x8x64xf32>,
      %186 = vector.extract_strided_slice %18 {offsets = [0, 0], sizes = [8, 1], strides = [1, 1]} : vector<8x8xf32> to vector<8x1xf32>
      %187 = vector.extract_strided_slice %36 {offsets = [0, 0], sizes = [8, 8], strides = [1, 1]} : vector<8x16xf32> to vector<8x8xf32>
      %188 = vector.broadcast %186 : vector<8x1xf32> to vector<8x8xf32>
      %189 = arith.mulf %188, %187 : vector<8x8xf32>
      %190 = vector.extract_strided_slice %39 {offsets = [0, 0], sizes = [8, 8], strides = [1, 1]} : vector<8x16xf32> to vector<8x8xf32>
      %191 = vector.broadcast %186 : vector<8x1xf32> to vector<8x8xf32>
      %192 = arith.mulf %191, %190 : vector<8x8xf32>
      %193 = vector.extract_strided_slice %18 {offsets = [0, 1], sizes = [8, 1], strides = [1, 1]} : vector<8x8xf32> to vector<8x1xf32>
      %194 = vector.extract_strided_slice %36 {offsets = [0, 8], sizes = [8, 8], strides = [1, 1]} : vector<8x16xf32> to vector<8x8xf32>
      %195 = vector.broadcast %193 : vector<8x1xf32> to vector<8x8xf32>
      %196 = arith.mulf %195, %194 : vector<8x8xf32>
      %197 = vector.extract_strided_slice %39 {offsets = [0, 8], sizes = [8, 8], strides = [1, 1]} : vector<8x16xf32> to vector<8x8xf32>
      %198 = vector.broadcast %193 : vector<8x1xf32> to vector<8x8xf32>
      %199 = arith.mulf %198, %197 : vector<8x8xf32>
      %200 = arith.addf %189, %196 : vector<8x8xf32>
      %201 = arith.addf %192, %199 : vector<8x8xf32>
      %202 = tpu.concatenate %200, %201 in 1 : vector<8x8xf32>, vector<8x8xf32> -> vector<8x16xf32>
      %203 = vector.extract_strided_slice %18 {offsets = [0, 2], sizes = [8, 1], strides = [1, 1]} : vector<8x8xf32> to vector<8x1xf32>
      %204 = vector.extract_strided_slice %36 {offsets = [0, 0], sizes = [8, 8], strides = [1, 1]} : vector<8x16xf32> to vector<8x8xf32>
      %205 = vector.broadcast %203 : vector<8x1xf32> to vector<8x8xf32>
      %206 = arith.mulf %205, %204 : vector<8x8xf32>
      %207 = vector.extract_strided_slice %39 {offsets = [0, 0], sizes = [8, 8], strides = [1, 1]} : vector<8x16xf32> to vector<8x8xf32>
      %208 = vector.broadcast %203 : vector<8x1xf32> to vector<8x8xf32>
      %209 = arith.mulf %208, %207 : vector<8x8xf32>
      %210 = vector.extract_strided_slice %18 {offsets = [0, 3], sizes = [8, 1], strides = [1, 1]} : vector<8x8xf32> to vector<8x1xf32>
      %211 = vector.extract_strided_slice %36 {offsets = [0, 8], sizes = [8, 8], strides = [1, 1]} : vector<8x16xf32> to vector<8x8xf32>
      %212 = vector.broadcast %210 : vector<8x1xf32> to vector<8x8xf32>
      %213 = arith.mulf %212, %211 : vector<8x8xf32>
      %214 = vector.extract_strided_slice %39 {offsets = [0, 8], sizes = [8, 8], strides = [1, 1]} : vector<8x16xf32> to vector<8x8xf32>
      %215 = vector.broadcast %210 : vector<8x1xf32> to vector<8x8xf32>
      %216 = arith.mulf %215, %214 : vector<8x8xf32>
      %217 = arith.addf %206, %213 : vector<8x8xf32>
      %218 = arith.addf %209, %216 : vector<8x8xf32>
      %219 = tpu.concatenate %217, %218 in 1 : vector<8x8xf32>, vector<8x8xf32> -> vector<8x16xf32>
      %220 = vector.extract_strided_slice %18 {offsets = [0, 4], sizes = [8, 1], strides = [1, 1]} : vector<8x8xf32> to vector<8x1xf32>
      %221 = vector.extract_strided_slice %36 {offsets = [0, 0], sizes = [8, 8], strides = [1, 1]} : vector<8x16xf32> to vector<8x8xf32>
      %222 = vector.broadcast %220 : vector<8x1xf32> to vector<8x8xf32>
      %223 = arith.mulf %222, %221 : vector<8x8xf32>
      %224 = vector.extract_strided_slice %39 {offsets = [0, 0], sizes = [8, 8], strides = [1, 1]} : vector<8x16xf32> to vector<8x8xf32>
      %225 = vector.broadcast %220 : vector<8x1xf32> to vector<8x8xf32>
      %226 = arith.mulf %225, %224 : vector<8x8xf32>
      %227 = vector.extract_strided_slice %18 {offsets = [0, 5], sizes = [8, 1], strides = [1, 1]} : vector<8x8xf32> to vector<8x1xf32>
      %228 = vector.extract_strided_slice %36 {offsets = [0, 8], sizes = [8, 8], strides = [1, 1]} : vector<8x16xf32> to vector<8x8xf32>
      %229 = vector.broadcast %227 : vector<8x1xf32> to vector<8x8xf32>
      %230 = arith.mulf %229, %228 : vector<8x8xf32>
      %231 = vector.extract_strided_slice %39 {offsets = [0, 8], sizes = [8, 8], strides = [1, 1]} : vector<8x16xf32> to vector<8x8xf32>
      %232 = vector.broadcast %227 : vector<8x1xf32> to vector<8x8xf32>
      %233 = arith.mulf %232, %231 : vector<8x8xf32>
      %234 = arith.addf %223, %230 : vector<8x8xf32>
      %235 = arith.addf %226, %233 : vector<8x8xf32>
      %236 = tpu.concatenate %234, %235 in 1 : vector<8x8xf32>, vector<8x8xf32> -> vector<8x16xf32>
      %237 = vector.extract_strided_slice %18 {offsets = [0, 6], sizes = [8, 1], strides = [1, 1]} : vector<8x8xf32> to vector<8x1xf32>
      %238 = vector.extract_strided_slice %36 {offsets = [0, 0], sizes = [8, 8], strides = [1, 1]} : vector<8x16xf32> to vector<8x8xf32>
      %239 = vector.broadcast %237 : vector<8x1xf32> to vector<8x8xf32>
      %240 = arith.mulf %239, %238 : vector<8x8xf32>
      %241 = vector.extract_strided_slice %39 {offsets = [0, 0], sizes = [8, 8], strides = [1, 1]} : vector<8x16xf32> to vector<8x8xf32>
      %242 = vector.broadcast %237 : vector<8x1xf32> to vector<8x8xf32>
      %243 = arith.mulf %242, %241 : vector<8x8xf32>
      %244 = vector.extract_strided_slice %18 {offsets = [0, 7], sizes = [8, 1], strides = [1, 1]} : vector<8x8xf32> to vector<8x1xf32>
      %245 = vector.extract_strided_slice %36 {offsets = [0, 8], sizes = [8, 8], strides = [1, 1]} : vector<8x16xf32> to vector<8x8xf32>
      %246 = vector.broadcast %244 : vector<8x1xf32> to vector<8x8xf32>
      %247 = arith.mulf %246, %245 : vector<8x8xf32>
      %248 = vector.extract_strided_slice %39 {offsets = [0, 8], sizes = [8, 8], strides = [1, 1]} : vector<8x16xf32> to vector<8x8xf32>
      %249 = vector.broadcast %244 : vector<8x1xf32> to vector<8x8xf32>
      %250 = arith.mulf %249, %248 : vector<8x8xf32>
      %251 = arith.addf %240, %247 : vector<8x8xf32>
      %252 = arith.addf %243, %250 : vector<8x8xf32>
      %253 = tpu.concatenate %251, %252 in 1 : vector<8x8xf32>, vector<8x8xf32> -> vector<8x16xf32>
      %254 = tpu.concatenate %202, %219, %236, %253 in 1 : vector<8x16xf32>, vector<8x16xf32>, vector<8x16xf32>, vector<8x16xf32> -> vector<8x64xf32>
      %cst_25 = arith.constant 5.000000e-01 : f32
      %255 = vector.broadcast %cst_25 : f32 to vector<8x64xf32>
      %256 = arith.mulf %254, %255 : vector<8x64xf32>
      %c0_26 = arith.constant 0 : index
      %c0_27 = arith.constant 0 : index
      %c0_28 = arith.constant 0 : index
      %257 = vector.load %arg10[%c0_26, %c0_27, %c0_28] : memref<1x8x64xf32, #tpu.memory_space<vmem>>, vector<1x8x64xf32>
      %258 = vector.shape_cast %257 : vector<1x8x64xf32> to vector<8x64xf32>
      %259 = vector.shape_cast %256 : vector<8x64xf32> to vector<1x8x64xf32>
      tpu.vector_store %arg10[%c0_26, %c0_27, %c0_28], %259 {strides = array<i32>} : memref<1x8x64xf32, #tpu.memory_space<vmem>>, vector<1x8x64xf32>,
      %260 = vector.extract_strided_slice %19 {offsets = [0, 0], sizes = [8, 1], strides = [1, 1]} : vector<8x8xf32> to vector<8x1xf32>
      %261 = vector.extract_strided_slice %16 {offsets = [0, 0], sizes = [8, 16], strides = [1, 1]} : vector<8x32xf32> to vector<8x16xf32>
      %262 = vector.broadcast %260 : vector<8x1xf32> to vector<8x16xf32>
      %263 = arith.mulf %262, %261 : vector<8x16xf32>
      %264 = vector.extract_strided_slice %19 {offsets = [0, 1], sizes = [8, 1], strides = [1, 1]} : vector<8x8xf32> to vector<8x1xf32>
      %265 = vector.extract_strided_slice %16 {offsets = [0, 16], sizes = [8, 16], strides = [1, 1]} : vector<8x32xf32> to vector<8x16xf32>
      %266 = vector.broadcast %264 : vector<8x1xf32> to vector<8x16xf32>
      %267 = arith.mulf %266, %265 : vector<8x16xf32>
      %268 = arith.addf %263, %267 : vector<8x16xf32>
      %269 = vector.extract_strided_slice %19 {offsets = [0, 2], sizes = [8, 1], strides = [1, 1]} : vector<8x8xf32> to vector<8x1xf32>
      %270 = vector.extract_strided_slice %16 {offsets = [0, 0], sizes = [8, 16], strides = [1, 1]} : vector<8x32xf32> to vector<8x16xf32>
      %271 = vector.broadcast %269 : vector<8x1xf32> to vector<8x16xf32>
      %272 = arith.mulf %271, %270 : vector<8x16xf32>
      %273 = vector.extract_strided_slice %19 {offsets = [0, 3], sizes = [8, 1], strides = [1, 1]} : vector<8x8xf32> to vector<8x1xf32>
      %274 = vector.extract_strided_slice %16 {offsets = [0, 16], sizes = [8, 16], strides = [1, 1]} : vector<8x32xf32> to vector<8x16xf32>
      %275 = vector.broadcast %273 : vector<8x1xf32> to vector<8x16xf32>
      %276 = arith.mulf %275, %274 : vector<8x16xf32>
      %277 = arith.addf %272, %276 : vector<8x16xf32>
      %278 = vector.extract_strided_slice %19 {offsets = [0, 4], sizes = [8, 1], strides = [1, 1]} : vector<8x8xf32> to vector<8x1xf32>
      %279 = vector.extract_strided_slice %16 {offsets = [0, 0], sizes = [8, 16], strides = [1, 1]} : vector<8x32xf32> to vector<8x16xf32>
      %280 = vector.broadcast %278 : vector<8x1xf32> to vector<8x16xf32>
      %281 = arith.mulf %280, %279 : vector<8x16xf32>
      %282 = vector.extract_strided_slice %19 {offsets = [0, 5], sizes = [8, 1], strides = [1, 1]} : vector<8x8xf32> to vector<8x1xf32>
      %283 = vector.extract_strided_slice %16 {offsets = [0, 16], sizes = [8, 16], strides = [1, 1]} : vector<8x32xf32> to vector<8x16xf32>
      %284 = vector.broadcast %282 : vector<8x1xf32> to vector<8x16xf32>
      %285 = arith.mulf %284, %283 : vector<8x16xf32>
      %286 = arith.addf %281, %285 : vector<8x16xf32>
      %287 = vector.extract_strided_slice %19 {offsets = [0, 6], sizes = [8, 1], strides = [1, 1]} : vector<8x8xf32> to vector<8x1xf32>
      %288 = vector.extract_strided_slice %16 {offsets = [0, 0], sizes = [8, 16], strides = [1, 1]} : vector<8x32xf32> to vector<8x16xf32>
      %289 = vector.broadcast %287 : vector<8x1xf32> to vector<8x16xf32>
      %290 = arith.mulf %289, %288 : vector<8x16xf32>
      %291 = vector.extract_strided_slice %19 {offsets = [0, 7], sizes = [8, 1], strides = [1, 1]} : vector<8x8xf32> to vector<8x1xf32>
      %292 = vector.extract_strided_slice %16 {offsets = [0, 16], sizes = [8, 16], strides = [1, 1]} : vector<8x32xf32> to vector<8x16xf32>
      %293 = vector.broadcast %291 : vector<8x1xf32> to vector<8x16xf32>
      %294 = arith.mulf %293, %292 : vector<8x16xf32>
      %295 = arith.addf %290, %294 : vector<8x16xf32>
      %296 = tpu.concatenate %268, %277, %286, %295 in 1 : vector<8x16xf32>, vector<8x16xf32>, vector<8x16xf32>, vector<8x16xf32> -> vector<8x64xf32>
      %cst_29 = arith.constant 5.000000e-01 : f32
      %297 = vector.broadcast %cst_29 : f32 to vector<8x64xf32>
      %298 = arith.mulf %296, %297 : vector<8x64xf32>
      %c0_30 = arith.constant 0 : index
      %c0_31 = arith.constant 0 : index
      %c0_32 = arith.constant 0 : index
      %299 = vector.load %arg11[%c0_30, %c0_31, %c0_32] : memref<1x8x64xf32, #tpu.memory_space<vmem>>, vector<1x8x64xf32>
      %300 = vector.shape_cast %299 : vector<1x8x64xf32> to vector<8x64xf32>
      %301 = vector.shape_cast %298 : vector<8x64xf32> to vector<1x8x64xf32>
      tpu.vector_store %arg11[%c0_30, %c0_31, %c0_32], %301 {strides = array<i32>} : memref<1x8x64xf32, #tpu.memory_space<vmem>>, vector<1x8x64xf32>,
    } else {
    }
    return
  }
  func.func @transform_0(%arg0: i32, %arg1: i32, %arg2: i32) -> (i32, i32, i32) {
    %c0_i32 = arith.constant 0 : i32
    return %arg0, %arg1, %arg2 : i32, i32, i32
  }
  func.func @transform_1(%arg0: i32, %arg1: i32, %arg2: i32) -> (i32, i32) {
    %c0_i32 = arith.constant 0 : i32
    %c0_i32_0 = arith.constant 0 : i32
    return %arg2, %c0_i32 : i32, i32
  }
  func.func @transform_2(%arg0: i32, %arg1: i32, %arg2: i32) -> (i32, i32) {
    %c0_i32 = arith.constant 0 : i32
    %c0_i32_0 = arith.constant 0 : i32
    return %arg1, %c0_i32 : i32, i32
  }
  func.func @transform_3(%arg0: i32, %arg1: i32, %arg2: i32) -> (i32, i32) {
    %c0_i32 = arith.constant 0 : i32
    %c0_i32_0 = arith.constant 0 : i32
    return %arg1, %c0_i32 : i32, i32
  }
  func.func @transform_4(%arg0: i32, %arg1: i32, %arg2: i32) -> (i32, i32) {
    %c0_i32 = arith.constant 0 : i32
    %c0_i32_0 = arith.constant 0 : i32
    return %arg1, %c0_i32 : i32, i32
  }
  func.func @transform_5(%arg0: i32, %arg1: i32, %arg2: i32) -> (i32, i32) {
    %c0_i32 = arith.constant 0 : i32
    %c0_i32_0 = arith.constant 0 : i32
    return %arg1, %c0_i32 : i32, i32
  }
  func.func @transform_6(%arg0: i32, %arg1: i32, %arg2: i32) -> (i32, i32, i32) {
    %c0_i32 = arith.constant 0 : i32
    %c0_i32_0 = arith.constant 0 : i32
    return %arg0, %arg1, %c0_i32 : i32, i32, i32
  }
  func.func @transform_7(%arg0: i32, %arg1: i32, %arg2: i32) -> (i32, i32, i32) {
    %c0_i32 = arith.constant 0 : i32
    %c0_i32_0 = arith.constant 0 : i32
    return %arg0, %arg1, %c0_i32 : i32, i32, i32
  }
  func.func @transform_8(%arg0: i32, %arg1: i32, %arg2: i32) -> (i32, i32, i32) {
    %c0_i32 = arith.constant 0 : i32
    %c0_i32_0 = arith.constant 0 : i32
    return %arg0, %arg1, %c0_i32 : i32, i32, i32
  }
}

</mosaic_0001>

<llo_original>
// kernel: tpu_custom_call.1
$region0: #{tpu_custom_call.1}
  #allocation0 [shape = 'u32[]', space=smem, size = 0x4, offset = 0x4, fixed_abs, tag = 'smem constant byte address 0x4 - core index']
  #allocation1 [shape = 'u32[144,128]{1,0:T(1,128)}', space=vmem, size = 0x12000, scoped, tag = 'internal scratch']
  #allocation2 [shape = 'f32[8,160]{1,0:T(8,128)}', space=vmem, size = 0x2000, scoped, tag = 'scratch operand']
  %s0 = inlined_call_operand.hbm [shape: f32[2,8,64], index: 0, kind: input, shape index: {}]
  %s1 = inlined_call_operand.hbm [shape: f32[64,160], index: 1, kind: input, shape index: {}]
  %s2 = inlined_call_operand.hbm [shape: f32[8,32], index: 2, kind: input, shape index: {}]
  %s3 = inlined_call_operand.vmem [shape: f32[8,32], index: 3, kind: input, shape index: {}]
  %s4 = inlined_call_operand.hbm [shape: f32[8,16], index: 4, kind: input, shape index: {}]
  %s5 = inlined_call_operand.vmem [shape: f32[8,16], index: 5, kind: input, shape index: {}]
  %s6 = inlined_call_operand.hbm [shape: f32[2,8,64], index: 6, kind: output, shape index: {0}]
  %s7 = inlined_call_operand.hbm [shape: f32[2,8,64], index: 7, kind: output, shape index: {1}]
  %s8 = inlined_call_operand.hbm [shape: f32[2,8,64], index: 8, kind: output, shape index: {2}]
  %9 = xla_tuple %s6, %s7, %s8
  %s10 = sld [smem:[#allocation0]]
  $region97: #{tpu_custom_call.1} parent=0
    _
  %s12 = ssub.s32 1, %s10
  %s13 = scalar_select 0, %s12, %s10
  $region1: #{tpu_custom_call.1} parent=0
    #allocation3 [shape = 'u8[8192]{0}', space=vmem, size = 0x2000, scoped, tag = 'input window, operand 0']
    #allocation4 [shape = 's32[2]{0}', space=sflag, size = 0x8, scoped, tag = 'scoped memory for tpu_custom_call.1']
    #allocation5 [shape = 's32[2]{0}', space=sflag, size = 0x8, scoped, tag = 'scoped memory for tpu_custom_call.1']
    #allocation6 [shape = 'u8[65536]{0}', space=vmem, size = 0x10000, scoped, tag = 'input window, operand 1, single buffered']
    #allocation7 [shape = 's32[1]{0}', space=sflag, size = 0x4, scoped, tag = 'scoped memory for tpu_custom_call.1']
    #allocation8 [shape = 'u8[4096]{0}', space=vmem, size = 0x1000, scoped, tag = 'input window, operand 2, single buffered']
    #allocation9 [shape = 'u8[4096]{0}', space=vmem, size = 0x1000, scoped, tag = 'input window, operand 4, single buffered']
    #allocation10 [shape = 's32[1]{0}', space=sflag, size = 0x4, scoped, tag = 'scoped memory for tpu_custom_call.1']
    #allocation11 [shape = 'u8[8192]{0}', space=vmem, size = 0x2000, scoped, tag = 'output window, operand 0']
    #allocation12 [shape = 'u8[8192]{0}', space=vmem, size = 0x2000, scoped, tag = 'output window, operand 1']
    #allocation13 [shape = 's32[2]{0}', space=sflag, size = 0x8, scoped, tag = 'scoped memory for tpu_custom_call.1']
    #allocation14 [shape = 'u8[8192]{0}', space=vmem, size = 0x2000, scoped, tag = 'output window, operand 2']
    %14 = vsyncpa [#allocation4], 0
    %s15 = scalar_lea.sflag [#allocation4], 1
    %16 = vsyncpa %s15, 0
    %17 = vsyncpa [#allocation7], 0
    %18 = vsyncpa [#allocation10], 0
    %19 = vsyncpa [#allocation5], 0
    %s20 = scalar_lea.sflag [#allocation5], 1
    %21 = vsyncpa %s20, 0
    %22 = vsyncpa [#allocation13], 0
    %s23 = scalar_lea.sflag [#allocation13], 1
    %24 = vsyncpa %s23, 0
    loop: start=0, step=1, limit=4
    $region2: #{tpu_custom_call.1} parent=1 // loop_pre_header
      _
    $region3: #{tpu_custom_call.1} parent=1 // loop_header
      %s26 = sphi 0, %s30
      %p27 = scmp.ge.s32.totalorder %s26, 4
      %s33 = sphi 0, %s52
      %s34 = sphi 0, %s48
      %s35 = sphi 0, %s44
      %s36 = sphi 0, %s33
      %s37 = sphi 0, %s34
      %s38 = sphi 0, %s35
      %s39 = sphi 0, %s36
      %s40 = sphi 0, %s37
      %s41 = sphi 0, %s38
      %s59 = sphi 0, %s61
      %s62 = sphi 0, %s59
      %s63 = sphi 0, %s62
      %s79 = sphi 0, %s63
      %s85 = sphi 0, %s87
      %s88 = sphi 0, %s85
      %s89 = sphi 0, %s88
      %s105 = sphi 0, %s89
      %s111 = sphi 0, %s113
      %s114 = sphi 0, %s111
      %s115 = sphi 0, %s114
      %s131 = sphi 0, %s115
      %s137 = sphi 0, %s139
      %s140 = sphi 0, %s137
      %s141 = sphi 0, %s140
      %s157 = sphi 0, %s141
      %s163 = sphi 0, %s165
      %s166 = sphi 0, %s163
      %s167 = sphi 0, %s166
      %s183 = sphi 0, %s167
      %s189 = sphi 0, %s191
      %s192 = sphi 0, %s189
      %s193 = sphi 0, %s192
      %s209 = sphi 0, %s193
      %s217 = sphi 0, %s219
      %s220 = sphi 0, %s217
      %s221 = sphi 0, %s220
      %s237 = sphi 0, %s221
      %s245 = sphi 0, %s247
      %s248 = sphi 0, %s245
      %s249 = sphi 0, %s248
      %s265 = sphi 0, %s249
      %s273 = sphi 0, %s275
      %s276 = sphi 0, %s273
      %s277 = sphi 0, %s276
      %s293 = sphi 0, %s277
    $region4: #{tpu_custom_call.1} parent=1 // loop_header_branch
      %29 = sbr.rel (%p27) target = $region8
    $region5: #{tpu_custom_call.1} parent=1 // loop_body
      %s31 = ssub.s32 %s26, 1
      %s32 = ssub.s32 %s26, 2
      %s42 = sadd.s32 1, %s35
      %p43 = scmp.ge.s32.totalorder %s42, 1
      %s44 = scalar_select %p43, 0, %s42
      %s45 = sadd.s32 1, %s34
      %s46 = scalar_select %p43, %s45, %s34
      %p47 = scmp.ge.s32.totalorder %s46, 1
      %s48 = scalar_select %p47, 0, %s46
      %s49 = sadd.s32 1, %s33
      %s50 = scalar_select %p47, %s49, %s33
      %p51 = scmp.ge.s32.totalorder %s50, 2
      %s52 = scalar_select %p51, 0, %s50
      %s53 = ssub.s32 %s33, %s52
      %s54 = ssub.s32 %s34, %s48
      %s55 = sor.u32 %s53, %s54
      %s56 = ssub.s32 %s35, %s44
      %s57 = sor.u32 %s55, %s56
      %p58 = scmp.eq.s32.totalorder %s57, 0
      %s60 = sadd.s32 %s59, 1
      %s61 = scalar_select %p58, %s59, %s60
      %p64 = pneg %p58
      %p65 = scmp.eq.s32.totalorder %s26, 1
      %p66 = por %p64, %p65
      %p67 = scmp.ne.s32.totalorder %s59, %s62
      %p68 = scmp.eq.s32.totalorder %s26, 0
      %p69 = por %p67, %p68
      %p70 = scmp.ne.s32.totalorder %s59, %s62
      %p71 = scmp.eq.s32.totalorder %s31, 1
      %p72 = por %p70, %p71
      %p73 = scmp.ne.s32.totalorder %s62, %s63
      %p74 = scmp.eq.s32.totalorder %s31, 0
      %p75 = por %p73, %p74
      %p76 = scmp.ne.s32.totalorder %s62, %s63
      %p77 = scmp.eq.s32.totalorder %s32, 1
      %p78 = por %p76, %p77
      %p80 = scmp.ne.s32.totalorder %s63, %s79
      %p81 = scmp.eq.s32.totalorder %s32, 0
      %p82 = por %p80, %p81
      %s83 = ssub.s32 %s35, %s44
      %p84 = scmp.eq.s32.totalorder %s83, 0
      %s86 = sadd.s32 %s85, 1
      %s87 = scalar_select %p84, %s85, %s86
      %p90 = pneg %p84
      %p91 = scmp.eq.s32.totalorder %s26, 1
      %p92 = por %p90, %p91
      %p93 = scmp.ne.s32.totalorder %s85, %s88
      %p94 = scmp.eq.s32.totalorder %s26, 0
      %p95 = por %p93, %p94
      %p96 = scmp.ne.s32.totalorder %s85, %s88
      %p97 = scmp.eq.s32.totalorder %s31, 1
      %p98 = por %p96, %p97
      %p99 = scmp.ne.s32.totalorder %s88, %s89
      %p100 = scmp.eq.s32.totalorder %s31, 0
      %p101 = por %p99, %p100
      %p102 = scmp.ne.s32.totalorder %s88, %s89
      %p103 = scmp.eq.s32.totalorder %s32, 1
      %p104 = por %p102, %p103
      %p106 = scmp.ne.s32.totalorder %s89, %s105
      %p107 = scmp.eq.s32.totalorder %s32, 0
      %p108 = por %p106, %p107
      %s109 = ssub.s32 %s34, %s48
      %p110 = scmp.eq.s32.totalorder %s109, 0
      %s112 = sadd.s32 %s111, 1
      %s113 = scalar_select %p110, %s111, %s112
      %p116 = pneg %p110
      %p117 = scmp.eq.s32.totalorder %s26, 1
      %p118 = por %p116, %p117
      %p119 = scmp.ne.s32.totalorder %s111, %s114
      %p120 = scmp.eq.s32.totalorder %s26, 0
      %p121 = por %p119, %p120
      %p122 = scmp.ne.s32.totalorder %s111, %s114
      %p123 = scmp.eq.s32.totalorder %s31, 1
      %p124 = por %p122, %p123
      %p125 = scmp.ne.s32.totalorder %s114, %s115
      %p126 = scmp.eq.s32.totalorder %s31, 0
      %p127 = por %p125, %p126
      %p128 = scmp.ne.s32.totalorder %s114, %s115
      %p129 = scmp.eq.s32.totalorder %s32, 1
      %p130 = por %p128, %p129
      %p132 = scmp.ne.s32.totalorder %s115, %s131
      %p133 = scmp.eq.s32.totalorder %s32, 0
      %p134 = por %p132, %p133
      %s135 = ssub.s32 %s34, %s48
      %p136 = scmp.eq.s32.totalorder %s135, 0
      %s138 = sadd.s32 %s137, 1
      %s139 = scalar_select %p136, %s137, %s138
      %p142 = pneg %p136
      %p143 = scmp.eq.s32.totalorder %s26, 1
      %p144 = por %p142, %p143
      %p145 = scmp.ne.s32.totalorder %s137, %s140
      %p146 = scmp.eq.s32.totalorder %s26, 0
      %p147 = por %p145, %p146
      %p148 = scmp.ne.s32.totalorder %s137, %s140
      %p149 = scmp.eq.s32.totalorder %s31, 1
      %p150 = por %p148, %p149
      %p151 = scmp.ne.s32.totalorder %s140, %s141
      %p152 = scmp.eq.s32.totalorder %s31, 0
      %p153 = por %p151, %p152
      %p154 = scmp.ne.s32.totalorder %s140, %s141
      %p155 = scmp.eq.s32.totalorder %s32, 1
      %p156 = por %p154, %p155
      %p158 = scmp.ne.s32.totalorder %s141, %s157
      %p159 = scmp.eq.s32.totalorder %s32, 0
      %p160 = por %p158, %p159
      %s161 = ssub.s32 %s34, %s48
      %p162 = scmp.eq.s32.totalorder %s161, 0
      %s164 = sadd.s32 %s163, 1
      %s165 = scalar_select %p162, %s163, %s164
      %p168 = pneg %p162
      %p169 = scmp.eq.s32.totalorder %s26, 1
      %p170 = por %p168, %p169
      %p171 = scmp.ne.s32.totalorder %s163, %s166
      %p172 = scmp.eq.s32.totalorder %s26, 0
      %p173 = por %p171, %p172
      %p174 = scmp.ne.s32.totalorder %s163, %s166
      %p175 = scmp.eq.s32.totalorder %s31, 1
      %p176 = por %p174, %p175
      %p177 = scmp.ne.s32.totalorder %s166, %s167
      %p178 = scmp.eq.s32.totalorder %s31, 0
      %p179 = por %p177, %p178
      %p180 = scmp.ne.s32.totalorder %s166, %s167
      %p181 = scmp.eq.s32.totalorder %s32, 1
      %p182 = por %p180, %p181
      %p184 = scmp.ne.s32.totalorder %s167, %s183
      %p185 = scmp.eq.s32.totalorder %s32, 0
      %p186 = por %p184, %p185
      %s187 = ssub.s32 %s34, %s48
      %p188 = scmp.eq.s32.totalorder %s187, 0
      %s190 = sadd.s32 %s189, 1
      %s191 = scalar_select %p188, %s189, %s190
      %p194 = pneg %p188
      %p195 = scmp.eq.s32.totalorder %s26, 1
      %p196 = por %p194, %p195
      %p197 = scmp.ne.s32.totalorder %s189, %s192
      %p198 = scmp.eq.s32.totalorder %s26, 0
      %p199 = por %p197, %p198
      %p200 = scmp.ne.s32.totalorder %s189, %s192
      %p201 = scmp.eq.s32.totalorder %s31, 1
      %p202 = por %p200, %p201
      %p203 = scmp.ne.s32.totalorder %s192, %s193
      %p204 = scmp.eq.s32.totalorder %s31, 0
      %p205 = por %p203, %p204
      %p206 = scmp.ne.s32.totalorder %s192, %s193
      %p207 = scmp.eq.s32.totalorder %s32, 1
      %p208 = por %p206, %p207
      %p210 = scmp.ne.s32.totalorder %s193, %s209
      %p211 = scmp.eq.s32.totalorder %s32, 0
      %p212 = por %p210, %p211
      %s213 = ssub.s32 %s33, %s52
      %s214 = ssub.s32 %s34, %s48
      %s215 = sor.u32 %s213, %s214
      %p216 = scmp.eq.s32.totalorder %s215, 0
      %s218 = sadd.s32 %s217, 1
      %s219 = scalar_select %p216, %s217, %s218
      %p222 = pneg %p216
      %p223 = scmp.eq.s32.totalorder %s26, 1
      %p224 = por %p222, %p223
      %p225 = scmp.ne.s32.totalorder %s217, %s220
      %p226 = scmp.eq.s32.totalorder %s26, 0
      %p227 = por %p225, %p226
      %p228 = scmp.ne.s32.totalorder %s217, %s220
      %p229 = scmp.eq.s32.totalorder %s31, 1
      %p230 = por %p228, %p229
      %p231 = scmp.ne.s32.totalorder %s220, %s221
      %p232 = scmp.eq.s32.totalorder %s31, 0
      %p233 = por %p231, %p232
      %p234 = scmp.ne.s32.totalorder %s220, %s221
      %p235 = scmp.eq.s32.totalorder %s32, 1
      %p236 = por %p234, %p235
      %p238 = scmp.ne.s32.totalorder %s221, %s237
      %p239 = scmp.eq.s32.totalorder %s32, 0
      %p240 = por %p238, %p239
      %s241 = ssub.s32 %s33, %s52
      %s242 = ssub.s32 %s34, %s48
      %s243 = sor.u32 %s241, %s242
      %p244 = scmp.eq.s32.totalorder %s243, 0
      %s246 = sadd.s32 %s245, 1
      %s247 = scalar_select %p244, %s245, %s246
      %p250 = pneg %p244
      %p251 = scmp.eq.s32.totalorder %s26, 1
      %p252 = por %p250, %p251
      %p253 = scmp.ne.s32.totalorder %s245, %s248
      %p254 = scmp.eq.s32.totalorder %s26, 0
      %p255 = por %p253, %p254
      %p256 = scmp.ne.s32.totalorder %s245, %s248
      %p257 = scmp.eq.s32.totalorder %s31, 1
      %p258 = por %p256, %p257
      %p259 = scmp.ne.s32.totalorder %s248, %s249
      %p260 = scmp.eq.s32.totalorder %s31, 0
      %p261 = por %p259, %p260
      %p262 = scmp.ne.s32.totalorder %s248, %s249
      %p263 = scmp.eq.s32.totalorder %s32, 1
      %p264 = por %p262, %p263
      %p266 = scmp.ne.s32.totalorder %s249, %s265
      %p267 = scmp.eq.s32.totalorder %s32, 0
      %p268 = por %p266, %p267
      %s269 = ssub.s32 %s33, %s52
      %s270 = ssub.s32 %s34, %s48
      %s271 = sor.u32 %s269, %s270
      %p272 = scmp.eq.s32.totalorder %s271, 0
      %s274 = sadd.s32 %s273, 1
      %s275 = scalar_select %p272, %s273, %s274
      %p278 = pneg %p272
      %p279 = scmp.eq.s32.totalorder %s26, 1
      %p280 = por %p278, %p279
      %p281 = scmp.ne.s32.totalorder %s273, %s276
      %p282 = scmp.eq.s32.totalorder %s26, 0
      %p283 = por %p281, %p282
      %p284 = scmp.ne.s32.totalorder %s273, %s276
      %p285 = scmp.eq.s32.totalorder %s31, 1
      %p286 = por %p284, %p285
      %p287 = scmp.ne.s32.totalorder %s276, %s277
      %p288 = scmp.eq.s32.totalorder %s31, 0
      %p289 = por %p287, %p288
      %p290 = scmp.ne.s32.totalorder %s276, %s277
      %p291 = scmp.eq.s32.totalorder %s32, 1
      %p292 = por %p290, %p291
      %p294 = scmp.ne.s32.totalorder %s277, %s293
      %p295 = scmp.eq.s32.totalorder %s32, 0
      %p296 = por %p294, %p295
      %p297 = scmp.le.s32.totalorder 1, %s26
      %p298 = scmp.lt.s32.totalorder %s26, 3
      %p299 = pnand %p297, %p298
      %p300 = pneg %p299
      // Predicated region
      $region9: #{tpu_custom_call.1} parent=5 // pred_check
        _
      $region10: #{tpu_custom_call.1} parent=5 // pred_check_branch
        %302 = sbr.rel (%p299) target = $region12
      $region11: #{tpu_custom_call.1} parent=5 // pred_region
        %s303 = ssub.s32 %s26, 1
        // Predicated region
        $region13: #{tpu_custom_call.1} parent=11 // pred_check
          %p304 = pneg %p101
        $region14: #{tpu_custom_call.1} parent=11 // pred_check_branch
          %306 = sbr.rel (%p304) target = $region16
        $region15: #{tpu_custom_call.1} parent=11 // pred_region
          %s307 = smul.u32 8, %s38
          %s309 = ssub.s32 2048, 2048
          %310 = vsyncadd [#allocation7], %s309
          %s311 = smul.addr %s307, 2
          %s312 = smul.addr %s311, 128
          %s313 = scalar_lea.hbm %s1, %s312
          %s314 = sshll.u32 [#allocation6], 4
          %s315 = int_to_ptr.vmem [resolvable:$true] %s314
          %320 = dma.hbm_to_vmem [thread:$0]  %s313, 2048, %s315, [#allocation7], 256, 256, 16
        $region16: #{tpu_custom_call.1} parent=11 // pred_fallthru
          _
        // Predicated region
        $region17: #{tpu_custom_call.1} parent=11 // pred_check
          %p321 = pneg %p127
        $region18: #{tpu_custom_call.1} parent=11 // pred_check_branch
          %323 = sbr.rel (%p321) target = $region20
        $region19: #{tpu_custom_call.1} parent=11 // pred_region
          %s325 = ssub.s32 128, 128
          %326 = vsyncadd [#allocation7], %s325
          %s327 = smul.addr %s37, 128
          %s328 = scalar_lea.hbm %s2, %s327
          %s330 = sshll.u32 [#allocation8], 4
          %s331 = int_to_ptr.vmem [resolvable:$true] %s330
          %333 = dma.hbm_to_vmem [thread:$0]  %s328, 128, %s331, [#allocation7]
        $region20: #{tpu_custom_call.1} parent=11 // pred_fallthru
          _
        // Predicated region
        $region21: #{tpu_custom_call.1} parent=11 // pred_check
          %p334 = pneg %p153
        $region22: #{tpu_custom_call.1} parent=11 // pred_check_branch
          %336 = sbr.rel (%p334) target = $region24
        $region23: #{tpu_custom_call.1} parent=11 // pred_region
          %p337 = scmp.lt.s32.totalorder %s37, 0
          %s338 = scalar_select %p337, %s37, 0
          %s339 = smul.addr %s338, 8
          %s340 = scalar_lea.vmem %s3, %s339
        $region24: #{tpu_custom_call.1} parent=11 // pred_fallthru
          _
        // Predicated region
        $region25: #{tpu_custom_call.1} parent=11 // pred_check
          %p341 = pneg %p179
        $region26: #{tpu_custom_call.1} parent=11 // pred_check_branch
          %343 = sbr.rel (%p341) target = $region28
        $region27: #{tpu_custom_call.1} parent=11 // pred_region
          %s345 = ssub.s32 128, 128
          %346 = vsyncadd [#allocation10], %s345
          %s347 = smul.addr %s37, 128
          %s348 = scalar_lea.hbm %s4, %s347
          %s350 = sshll.u32 [#allocation9], 4
          %s351 = int_to_ptr.vmem [resolvable:$true] %s350
          %353 = dma.hbm_to_vmem [thread:$0]  %s348, 128, %s351, [#allocation10]
        $region28: #{tpu_custom_call.1} parent=11 // pred_fallthru
          _
        // Predicated region
        $region29: #{tpu_custom_call.1} parent=11 // pred_check
          %p354 = pneg %p205
        $region30: #{tpu_custom_call.1} parent=11 // pred_check_branch
          %356 = sbr.rel (%p354) target = $region32
        $region31: #{tpu_custom_call.1} parent=11 // pred_region
          %p357 = scmp.lt.s32.totalorder %s37, 0
          %s358 = scalar_select %p357, %s37, 0
          %s359 = smul.addr %s358, 8
          %s360 = scalar_lea.vmem %s5, %s359
        $region32: #{tpu_custom_call.1} parent=11 // pred_fallthru
          _
      $region12: #{tpu_custom_call.1} parent=5 // pred_fallthru
        _
      %p361 = scmp.lt.s32.totalorder %s26, 2
      // Predicated region
      $region33: #{tpu_custom_call.1} parent=5 // pred_check
        %p362 = pneg %p361
      $region34: #{tpu_custom_call.1} parent=5 // pred_check_branch
        %364 = sbr.rel (%p362) target = $region36
      $region35: #{tpu_custom_call.1} parent=5 // pred_region
        // Predicated region
        $region37: #{tpu_custom_call.1} parent=35 // pred_check
          %p365 = pneg %p69
        $region38: #{tpu_custom_call.1} parent=35 // pred_check_branch
          %367 = sbr.rel (%p365) target = $region40
        $region39: #{tpu_custom_call.1} parent=35 // pred_region
          %s368 = sand.u32 %s59, 1
          %s369 = scalar_lea.sflag [#allocation4], %s368
          %s370 = sand.u32 %s59, 1
          %s371 = smul.addr %s370, 8
          %s372 = scalar_lea.vmem [#allocation3], %s371
          %s374 = ssub.s32 128, 128
          %375 = vsyncadd %s369, %s374
          %s376 = sadd.s32 %s35, %s34
          %s377 = sadd.s32 %s376, %s33
          %s378 = smul.addr %s377, 128
          %s379 = scalar_lea.hbm %s0, %s378
          %s381 = sshll.u32 %s372, 4
          %s382 = int_to_ptr.vmem [resolvable:$true] %s381
          %384 = dma.hbm_to_vmem [thread:$0]  %s379, 128, %s382, %s369
        $region40: #{tpu_custom_call.1} parent=35 // pred_fallthru
          _
      $region36: #{tpu_custom_call.1} parent=5 // pred_fallthru
        _
      %p385 = scmp.le.s32.totalorder 1, %s26
      %p386 = scmp.lt.s32.totalorder %s26, 3
      %p387 = pnand %p385, %p386
      %p388 = pneg %p387
      // Predicated region
      $region41: #{tpu_custom_call.1} parent=5 // pred_check
        _
      $region42: #{tpu_custom_call.1} parent=5 // pred_check_branch
        %390 = sbr.rel (%p387) target = $region44
      $region43: #{tpu_custom_call.1} parent=5 // pred_region
        %s391 = ssub.s32 %s26, 1
        %s392 = sand.u32 %s62, 1
        %s393 = scalar_lea.sflag [#allocation4], %s392
        %s394 = sand.u32 %s62, 1
        %s395 = smul.addr %s394, 8
        %s396 = scalar_lea.vmem [#allocation3], %s395
        // Predicated region
        $region45: #{tpu_custom_call.1} parent=43 // pred_check
          %p397 = pneg %p75
        $region46: #{tpu_custom_call.1} parent=43 // pred_check_branch
          %399 = sbr.rel (%p397) target = $region48
        $region47: #{tpu_custom_call.1} parent=43 // pred_region
          %400 = dma.done %s393, 128
        $region48: #{tpu_custom_call.1} parent=43 // pred_fallthru
          _
        // Predicated region
        $region49: #{tpu_custom_call.1} parent=43 // pred_check
          %p401 = pneg %p101
        $region50: #{tpu_custom_call.1} parent=43 // pred_check_branch
          %403 = sbr.rel (%p401) target = $region52
        $region51: #{tpu_custom_call.1} parent=43 // pred_region
          %404 = dma.done [#allocation7], 2048
        $region52: #{tpu_custom_call.1} parent=43 // pred_fallthru
          _
        // Predicated region
        $region53: #{tpu_custom_call.1} parent=43 // pred_check
          %p405 = pneg %p127
        $region54: #{tpu_custom_call.1} parent=43 // pred_check_branch
          %407 = sbr.rel (%p405) target = $region56
        $region55: #{tpu_custom_call.1} parent=43 // pred_region
          %408 = dma.done [#allocation7], 128
        $region56: #{tpu_custom_call.1} parent=43 // pred_fallthru
          _
        // Predicated region
        $region57: #{tpu_custom_call.1} parent=43 // pred_check
          %p409 = pneg %p179
        $region58: #{tpu_custom_call.1} parent=43 // pred_check_branch
          %411 = sbr.rel (%p409) target = $region60
        $region59: #{tpu_custom_call.1} parent=43 // pred_region
          %412 = dma.done [#allocation10], 128
        $region60: #{tpu_custom_call.1} parent=43 // pred_fallthru
          _
        %s413 = sand.u32 %s62, 1
        %s414 = scalar_lea.sflag [#allocation4], %s413
        %s415 = sand.u32 %s62, 1
        %s416 = smul.addr %s415, 8
        %s417 = scalar_lea.vmem [#allocation3], %s416
        %p418 = pneg %p75
        %p419 = pneg %p72
        %p420 = pneg %p101
        %p421 = pneg %p98
        %p422 = pneg %p127
        %p423 = pneg %p124
        %p424 = scmp.lt.s32.totalorder %s37, 0
        %s425 = scalar_select %p424, %s37, 0
        %s426 = smul.addr %s425, 8
        %s427 = scalar_lea.vmem %s3, %s426
        %p428 = pneg %p153
        %p429 = pneg %p150
        %p430 = pneg %p179
        %p431 = pneg %p176
        %p432 = scmp.lt.s32.totalorder %s37, 0
        %s433 = scalar_select %p432, %s37, 0
        %s434 = smul.addr %s433, 8
        %s435 = scalar_lea.vmem %s5, %s434
        %p436 = pneg %p205
        %p437 = pneg %p202
        %p438 = pneg %p233
        %p439 = pneg %p230
        %s440 = sand.u32 %s220, 1
        %s441 = scalar_lea.sflag [#allocation5], %s440
        %s442 = sand.u32 %s220, 1
        %s443 = smul.addr %s442, 8
        %s444 = scalar_lea.vmem [#allocation11], %s443
        %p445 = pneg %p261
        %p446 = pneg %p258
        %s447 = sand.u32 %s31, 1
        %s448 = scalar_lea.sflag [#allocation13], %s447
        %s449 = sand.u32 %s248, 1
        %s450 = smul.addr %s449, 8
        %s451 = scalar_lea.vmem [#allocation12], %s450
        %p452 = pneg %p289
        %p453 = pneg %p286
        %s454 = sand.u32 %s31, 1
        %s455 = scalar_lea.sflag [#allocation13], %s454
        %s456 = sand.u32 %s276, 1
        %s457 = smul.addr %s456, 8
        %s458 = scalar_lea.vmem [#allocation14], %s457
        %s459 = smul.u32 8, %s38
        %p460 = scmp.lt.s32.totalorder %s37, 0
        %s461 = scalar_select %p460, %s37, 0
        %s462 = smul.addr %s461, 8
        %s463 = scalar_lea.vmem %s3, %s462
        %p464 = scmp.lt.s32.totalorder %s37, 0
        %s465 = scalar_select %p464, %s37, 0
        %s466 = smul.addr %s465, 8
        %s467 = scalar_lea.vmem %s5, %s466
        %p468 = scmp.eq.s32.totalorder %s38, 0
        // Predicated region
        $region61: #{tpu_custom_call.1} parent=43 // pred_check
          %p469 = pneg %p468
        $region62: #{tpu_custom_call.1} parent=43 // pred_check_branch
          %471 = sbr.rel (%p469) target = $region64
        $region63: #{tpu_custom_call.1} parent=43 // pred_region
          %472 = vst [vmem:[#allocation2] sm:$0xff] 0.0
          %vm473 = vcmask 261120
          %474 = vst.msk [vmem:[#allocation2 + $0x8] sm:$0xff] %vm473, 0.0
        $region64: #{tpu_custom_call.1} parent=43 // pred_fallthru
          _
        %v475 = vld [vmem:[#allocation2] sm:$0xff]
        %v476 = vld [vmem:[#allocation2 + $0x8] sm:$0xff]
        %v477 = vld [vmem:[%s396] sm:$0xff]
        %v478 = vld [vmem:[#allocation6] sm:$0xff]
        %v479 = vld [vmem:[#allocation6 + $0x8] sm:$0xff]
        %v480 = vld [vmem:[#allocation6 + $0x10] sm:$0xff]
        %v481 = vld [vmem:[#allocation6 + $0x18] sm:$0xff]
        %v482 = vld [vmem:[#allocation6 + $0x20] sm:$0xff]
        %v483 = vld [vmem:[#allocation6 + $0x28] sm:$0xff]
        %v484 = vld [vmem:[#allocation6 + $0x30] sm:$0xff]
        %v485 = vld [vmem:[#allocation6 + $0x38] sm:$0xff]
        %v486 = vld [vmem:[#allocation6 + $0x40] sm:$0xff]
        %v487 = vld [vmem:[#allocation6 + $0x48] sm:$0xff]
        %v488 = vld [vmem:[#allocation6 + $0x50] sm:$0xff]
        %v489 = vld [vmem:[#allocation6 + $0x58] sm:$0xff]
        %v490 = vld [vmem:[#allocation6 + $0x60] sm:$0xff]
        %v491 = vld [vmem:[#allocation6 + $0x68] sm:$0xff]
        %v492 = vld [vmem:[#allocation6 + $0x70] sm:$0xff]
        %v493 = vld [vmem:[#allocation6 + $0x78] sm:$0xff]
        %vm494 = vcmask 523264
        %v496 = vsel %vm494, %v477, 0
        %498 = vmatprep.subr.mxu0 %v479
        %499 = vmatpush1.msra.mxu0 %v478
        %500 = vmatprep.subr.mxu0 %v481
        %501 = vmatpush1.msra.mxu0 %v480
        %502 = vmatprep.subr.mxu0 %v483
        %503 = vmatpush1.msra.mxu0 %v482
        %504 = vmatprep.subr.mxu0 %v485
        %505 = vmatpush1.msra.mxu0 %v484
        %506 = vmatprep.subr.mxu0 %v487
        %507 = vmatpush1.msra.mxu0 %v486
        %508 = vmatprep.subr.mxu0 %v489
        %509 = vmatpush1.msra.mxu0 %v488
        %510 = vmatprep.subr.mxu0 %v491
        %511 = vmatpush1.msra.mxu0 %v490
        %512 = vmatprep.subr.mxu0 %v493
        %513 = vmatpush1.msra.mxu0 %v492
        %514 = vmatprep.subr.mxu0 0.0
        %515 = vmatpush1.msra.mxu0 0.0
        %516 = vmatprep.subr.mxu0 0.0
        %517 = vmatpush1.msra.mxu0 0.0
        %518 = vmatprep.subr.mxu0 0.0
        %519 = vmatpush1.msra.mxu0 0.0
        %520 = vmatprep.subr.mxu0 0.0
        %521 = vmatpush1.msra.mxu0 0.0
        %522 = vmatprep.subr.mxu0 0.0
        %523 = vmatpush1.msra.mxu0 0.0
        %524 = vmatprep.subr.mxu0 0.0
        %525 = vmatpush1.msra.mxu0 0.0
        %526 = vmatprep.subr.mxu0 0.0
        %527 = vmatpush1.msra.mxu0 0.0
        %528 = vmatprep.subr.mxu0 0.0
        %529 = vmatpush1.msra.mxu0 0.0
        %530 = vmatprep.subr.mxu0 0.0
        %531 = vmatpush1.msra.mxu0 0.0
        %532 = vmatprep.subr.mxu0 0.0
        %533 = vmatpush1.msra.mxu0 0.0
        %534 = vmatprep.subr.mxu0 0.0
        %535 = vmatpush1.msra.mxu0 0.0
        %536 = vmatprep.subr.mxu0 0.0
        %537 = vmatpush1.msra.mxu0 0.0
        %538 = vmatprep.subr.mxu0 0.0
        %539 = vmatpush1.msra.mxu0 0.0
        %540 = vmatprep.subr.mxu0 0.0
        %541 = vmatpush1.msra.mxu0 0.0
        %542 = vmatprep.subr.mxu0 0.0
        %543 = vmatpush1.msra.mxu0 0.0
        %544 = vmatprep.subr.mxu0 0.0
        %545 = vmatpush1.msra.mxu0 0.0
        %546 = vmatprep.subr.mxu0 0.0
        %547 = vmatpush1.msra.mxu0 0.0
        %548 = vmatprep.subr.mxu0 0.0
        %549 = vmatpush1.msra.mxu0 0.0
        %550 = vmatprep.subr.mxu0 0.0
        %551 = vmatpush1.msra.mxu0 0.0
        %552 = vmatprep.subr.mxu0 0.0
        %553 = vmatpush1.msra.mxu0 0.0
        %554 = vmatprep.subr.mxu0 0.0
        %555 = vmatpush1.msra.mxu0 0.0
        %556 = vmatprep.subr.mxu0 0.0
        %557 = vmatpush1.msra.mxu0 0.0
        %558 = vmatprep.subr.mxu0 0.0
        %559 = vmatpush1.msra.mxu0 0.0
        %560 = vmatprep.subr.mxu0 0.0
        %561 = vmatpush1.msra.mxu0 0.0
        %562 = vmatprep.mubr.f32.mxu0 0.0
        %563 = vmatmul.mubr.f32.gmra.mrb[0].mxu0 %v496
        %v564 = vpop.f32.mrb[0].mxu0
        %v565 = vadd.f32 0.0, %v564
        %v566 = vpop.f32.mrb[0].mxu0
        %v567 = vadd.f32 0.0, %v566
        %568 = vdwg.mxu0
        %v569 = vadd.f32 %v475, %v565
        %v570 = vadd.f32 %v476, %v567
        %571 = vst [vmem:[#allocation2] sm:$0xff] %v569
        %vm572 = vcmask 261120
        %573 = vst.msk [vmem:[#allocation2 + $0x8] sm:$0xff] %vm572, %v570
        // Predicated region
        $region65: #{tpu_custom_call.1} parent=43 // pred_check
          %p574 = pneg %p468
        $region66: #{tpu_custom_call.1} parent=43 // pred_check_branch
          %576 = sbr.rel (%p574) target = $region68
        $region67: #{tpu_custom_call.1} parent=43 // pred_region
          %v577 = vld [vmem:[#allocation2] sm:$0xff]
          %v578 = vld [vmem:[#allocation2 + $0x8] sm:$0xff]
          %v579 = vld [vmem:[#allocation8] sm:$0xff]
          %v580 = vld [vmem:[%s463] sm:$0xff]
          %v581 = vmul.f32 %v577, %v579
          %583 = vrot.lane.b32.xlu0 %v580, 32
          %v584 = vpop.permute.xlu0 %583
          %v586 = vmul.f32 %v577, %v584
          %588 = vrot.lane.b32.xlu0 %v586, 96
          %v589 = vpop.permute.xlu0 %588
          %v591 = vsub.f32 %v581, %v589
          %v592 = vmul.f32 %v577, %v580
          %594 = vrot.lane.b32.xlu0 %v579, 32
          %v595 = vpop.permute.xlu0 %594
          %v597 = vmul.f32 %v577, %v595
          %599 = vrot.lane.b32.xlu0 %v597, 96
          %v600 = vpop.permute.xlu0 %599
          %v602 = vadd.f32 %v592, %v600
          %v603 = vld [vmem:[#allocation9] sm:$0xff]
          %v604 = vld [vmem:[%s467] sm:$0xff]
          %606 = vrot.lane.b32.xlu0 %v603, 64
          %v607 = vpop.permute.xlu0 %606
          %v609 = vmul.f32 %v577, %v607
          %611 = vrot.lane.b32.xlu0 %v604, 80
          %v612 = vpop.permute.xlu0 %611
          %v614 = vmul.f32 %v577, %v612
          %616 = vrot.lane.b32.xlu0 %v614, 112
          %v617 = vpop.permute.xlu0 %616
          %v619 = vsub.f32 %v609, %v617
          %620 = vrot.lane.b32.xlu0 %v604, 64
          %v621 = vpop.permute.xlu0 %620
          %v623 = vmul.f32 %v577, %v621
          %624 = vrot.lane.b32.xlu0 %v603, 80
          %v625 = vpop.permute.xlu0 %624
          %v627 = vmul.f32 %v577, %v625
          %629 = vrot.lane.b32.xlu0 %v627, 112
          %v630 = vpop.permute.xlu0 %629
          %v632 = vadd.f32 %v623, %v630
          %634 = vset.pattern.permute.xlu0 0
          %635 = vperm.xlu0 %634, %v578
          %v636 = vpop.permute.xlu0 %635
          %v638 = vmul.f32 %v636, %v591
          %v639 = vmul.f32 %v636, %v602
          %640 = vset.pattern.permute.xlu0 1
          %641 = vperm.xlu0 %640, %v578
          %v642 = vpop.permute.xlu0 %641
          %v644 = vmul.f32 %v642, %v591
          %v645 = vmul.f32 %v642, %v602
          %647 = vrot.lane.b32.xlu0 %v644, 120
          %v648 = vpop.permute.xlu0 %647
          %v650 = vadd.f32 %v638, %v648
          %652 = vrot.lane.b32.xlu0 %v645, 120
          %v653 = vpop.permute.xlu0 %652
          %v655 = vadd.f32 %v639, %v653
          %656 = vset.pattern.permute.xlu0 2
          %657 = vperm.xlu0 %656, %v578
          %v658 = vpop.permute.xlu0 %657
          %v660 = vmul.f32 %v658, %v591
          %v661 = vmul.f32 %v658, %v602
          %663 = vrot.lane.b32.xlu0 %v660, 112
          %v664 = vpop.permute.xlu0 %663
          %v666 = vadd.f32 %v650, %v664
          %668 = vrot.lane.b32.xlu0 %v661, 112
          %v669 = vpop.permute.xlu0 %668
          %v671 = vadd.f32 %v655, %v669
          %672 = vset.pattern.permute.xlu0 3
          %673 = vperm.xlu0 %672, %v578
          %v674 = vpop.permute.xlu0 %673
          %v676 = vmul.f32 %v674, %v591
          %v677 = vmul.f32 %v674, %v602
          %679 = vrot.lane.b32.xlu0 %v676, 104
          %v680 = vpop.permute.xlu0 %679
          %v682 = vadd.f32 %v666, %v680
          %684 = vrot.lane.b32.xlu0 %v677, 104
          %v685 = vpop.permute.xlu0 %684
          %v687 = vadd.f32 %v671, %v685
          %689 = vrot.lane.b32.xlu0 %v687, 8
          %v690 = vpop.permute.xlu0 %689
          %vm692 = vcmask 64512
          %v693 = vsel %vm692, %v682, %v690
          %694 = vset.pattern.permute.xlu0 4
          %695 = vperm.xlu0 %694, %v578
          %v696 = vpop.permute.xlu0 %695
          %v698 = vmul.f32 %v696, %v591
          %v699 = vmul.f32 %v696, %v602
          %700 = vset.pattern.permute.xlu0 5
          %701 = vperm.xlu0 %700, %v578
          %v702 = vpop.permute.xlu0 %701
          %v704 = vmul.f32 %v702, %v591
          %v705 = vmul.f32 %v702, %v602
          %707 = vrot.lane.b32.xlu0 %v704, 120
          %v708 = vpop.permute.xlu0 %707
          %v710 = vadd.f32 %v698, %v708
          %712 = vrot.lane.b32.xlu0 %v705, 120
          %v713 = vpop.permute.xlu0 %712
          %v715 = vadd.f32 %v699, %v713
          %716 = vset.pattern.permute.xlu0 6
          %717 = vperm.xlu0 %716, %v578
          %v718 = vpop.permute.xlu0 %717
          %v720 = vmul.f32 %v718, %v591
          %v721 = vmul.f32 %v718, %v602
          %723 = vrot.lane.b32.xlu0 %v720, 112
          %v724 = vpop.permute.xlu0 %723
          %v726 = vadd.f32 %v710, %v724
          %728 = vrot.lane.b32.xlu0 %v721, 112
          %v729 = vpop.permute.xlu0 %728
          %v731 = vadd.f32 %v715, %v729
          %732 = vset.pattern.permute.xlu0 7
          %733 = vperm.xlu0 %732, %v578
          %v734 = vpop.permute.xlu0 %733
          %v736 = vmul.f32 %v734, %v591
          %v737 = vmul.f32 %v734, %v602
          %739 = vrot.lane.b32.xlu0 %v736, 104
          %v740 = vpop.permute.xlu0 %739
          %v742 = vadd.f32 %v726, %v740
          %744 = vrot.lane.b32.xlu0 %v737, 104
          %v745 = vpop.permute.xlu0 %744
          %v747 = vadd.f32 %v731, %v745
          %749 = vrot.lane.b32.xlu0 %v747, 8
          %v750 = vpop.permute.xlu0 %749
          %v752 = vsel %vm692, %v742, %v750
          %753 = vset.pattern.permute.xlu0 8
          %754 = vperm.xlu0 %753, %v578
          %v755 = vpop.permute.xlu0 %754
          %v757 = vmul.f32 %v755, %v591
          %v758 = vmul.f32 %v755, %v602
          %759 = vset.pattern.permute.xlu0 9
          %760 = vperm.xlu0 %759, %v578
          %v761 = vpop.permute.xlu0 %760
          %v763 = vmul.f32 %v761, %v591
          %v764 = vmul.f32 %v761, %v602
          %766 = vrot.lane.b32.xlu0 %v763, 120
          %v767 = vpop.permute.xlu0 %766
          %v769 = vadd.f32 %v757, %v767
          %771 = vrot.lane.b32.xlu0 %v764, 120
          %v772 = vpop.permute.xlu0 %771
          %v774 = vadd.f32 %v758, %v772
          %775 = vset.pattern.permute.xlu0 10
          %776 = vperm.xlu0 %775, %v578
          %v777 = vpop.permute.xlu0 %776
          %v779 = vmul.f32 %v777, %v591
          %v780 = vmul.f32 %v777, %v602
          %782 = vrot.lane.b32.xlu0 %v779, 112
          %v783 = vpop.permute.xlu0 %782
          %v785 = vadd.f32 %v769, %v783
          %787 = vrot.lane.b32.xlu0 %v780, 112
          %v788 = vpop.permute.xlu0 %787
          %v790 = vadd.f32 %v774, %v788
          %791 = vset.pattern.permute.xlu0 11
          %792 = vperm.xlu0 %791, %v578
          %v793 = vpop.permute.xlu0 %792
          %v795 = vmul.f32 %v793, %v591
          %v796 = vmul.f32 %v793, %v602
          %798 = vrot.lane.b32.xlu0 %v795, 104
          %v799 = vpop.permute.xlu0 %798
          %v801 = vadd.f32 %v785, %v799
          %803 = vrot.lane.b32.xlu0 %v796, 104
          %v804 = vpop.permute.xlu0 %803
          %v806 = vadd.f32 %v790, %v804
          %808 = vrot.lane.b32.xlu0 %v806, 8
          %v809 = vpop.permute.xlu0 %808
          %v811 = vsel %vm692, %v801, %v809
          %812 = vset.pattern.permute.xlu0 12
          %813 = vperm.xlu0 %812, %v578
          %v814 = vpop.permute.xlu0 %813
          %v816 = vmul.f32 %v814, %v591
          %v817 = vmul.f32 %v814, %v602
          %818 = vset.pattern.permute.xlu0 13
          %819 = vperm.xlu0 %818, %v578
          %v820 = vpop.permute.xlu0 %819
          %v822 = vmul.f32 %v820, %v591
          %v823 = vmul.f32 %v820, %v602
          %825 = vrot.lane.b32.xlu0 %v822, 120
          %v826 = vpop.permute.xlu0 %825
          %v828 = vadd.f32 %v816, %v826
          %830 = vrot.lane.b32.xlu0 %v823, 120
          %v831 = vpop.permute.xlu0 %830
          %v833 = vadd.f32 %v817, %v831
          %834 = vset.pattern.permute.xlu0 14
          %835 = vperm.xlu0 %834, %v578
          %v836 = vpop.permute.xlu0 %835
          %v838 = vmul.f32 %v836, %v591
          %v839 = vmul.f32 %v836, %v602
          %841 = vrot.lane.b32.xlu0 %v838, 112
          %v842 = vpop.permute.xlu0 %841
          %v844 = vadd.f32 %v828, %v842
          %846 = vrot.lane.b32.xlu0 %v839, 112
          %v847 = vpop.permute.xlu0 %846
          %v849 = vadd.f32 %v833, %v847
          %850 = vset.pattern.permute.xlu0 15
          %851 = vperm.xlu0 %850, %v578
          %v852 = vpop.permute.xlu0 %851
          %v854 = vmul.f32 %v852, %v591
          %v855 = vmul.f32 %v852, %v602
          %857 = vrot.lane.b32.xlu0 %v854, 104
          %v858 = vpop.permute.xlu0 %857
          %v860 = vadd.f32 %v844, %v858
          %862 = vrot.lane.b32.xlu0 %v855, 104
          %v863 = vpop.permute.xlu0 %862
          %v865 = vadd.f32 %v849, %v863
          %867 = vrot.lane.b32.xlu0 %v865, 8
          %v868 = vpop.permute.xlu0 %867
          %v870 = vsel %vm692, %v860, %v868
          %872 = vrot.lane.b32.xlu0 %v752, 16
          %v873 = vpop.permute.xlu0 %872
          %876 = vrot.lane.b32.xlu0 %v811, 32
          %v877 = vpop.permute.xlu0 %876
          %880 = vrot.lane.b32.xlu0 %v870, 48
          %v881 = vpop.permute.xlu0 %880
          %vm883 = vcmask 130048
          %v884 = vsel %vm883, %v693, %v873
          %v885 = vsel %vm572, %v884, %v877
          %vm886 = vcmask 392192
          %v887 = vsel %vm886, %v885, %v881
          %v888 = vmul.f32 %v887, 0.0625
          %889 = vst.msk [vmem:[%s444] sm:$0xff] %vm494, %v888
          %890 = vset.pattern.permute.xlu0 16
          %891 = vperm.xlu0 %890, %v578
          %v892 = vpop.permute.xlu0 %891
          %v894 = vmul.f32 %v892, %v619
          %v895 = vmul.f32 %v892, %v632
          %896 = vset.pattern.permute.xlu0 17
          %897 = vperm.xlu0 %896, %v578
          %v898 = vpop.permute.xlu0 %897
          %v900 = vmul.f32 %v898, %v619
          %v901 = vmul.f32 %v898, %v632
          %903 = vrot.lane.b32.xlu0 %v900, 120
          %v904 = vpop.permute.xlu0 %903
          %v906 = vadd.f32 %v894, %v904
          %908 = vrot.lane.b32.xlu0 %v901, 120
          %v909 = vpop.permute.xlu0 %908
          %v911 = vadd.f32 %v895, %v909
          %913 = vrot.lane.b32.xlu0 %v906, 64
          %v914 = vpop.permute.xlu0 %913
          %917 = vrot.lane.b32.xlu0 %v911, 72
          %v918 = vpop.permute.xlu0 %917
          %v920 = vsel %vm692, %v914, %v918
          %921 = vset.pattern.permute.xlu0 18
          %922 = vperm.xlu0 %921, %v578
          %v923 = vpop.permute.xlu0 %922
          %v925 = vmul.f32 %v923, %v619
          %v926 = vmul.f32 %v923, %v632
          %927 = vset.pattern.permute.xlu0 19
          %928 = vperm.xlu0 %927, %v578
          %v929 = vpop.permute.xlu0 %928
          %v931 = vmul.f32 %v929, %v619
          %v932 = vmul.f32 %v929, %v632
          %934 = vrot.lane.b32.xlu0 %v931, 120
          %v935 = vpop.permute.xlu0 %934
          %v937 = vadd.f32 %v925, %v935
          %939 = vrot.lane.b32.xlu0 %v932, 120
          %v940 = vpop.permute.xlu0 %939
          %v942 = vadd.f32 %v926, %v940
          %944 = vrot.lane.b32.xlu0 %v937, 64
          %v945 = vpop.permute.xlu0 %944
          %948 = vrot.lane.b32.xlu0 %v942, 72
          %v949 = vpop.permute.xlu0 %948
          %v951 = vsel %vm692, %v945, %v949
          %952 = vset.pattern.permute.xlu0 20
          %953 = vperm.xlu0 %952, %v578
          %v954 = vpop.permute.xlu0 %953
          %v956 = vmul.f32 %v954, %v619
          %v957 = vmul.f32 %v954, %v632
          %958 = vset.pattern.permute.xlu0 21
          %959 = vperm.xlu0 %958, %v578
          %v960 = vpop.permute.xlu0 %959
          %v962 = vmul.f32 %v960, %v619
          %v963 = vmul.f32 %v960, %v632
          %965 = vrot.lane.b32.xlu0 %v962, 120
          %v966 = vpop.permute.xlu0 %965
          %v968 = vadd.f32 %v956, %v966
          %970 = vrot.lane.b32.xlu0 %v963, 120
          %v971 = vpop.permute.xlu0 %970
          %v973 = vadd.f32 %v957, %v971
          %975 = vrot.lane.b32.xlu0 %v968, 64
          %v976 = vpop.permute.xlu0 %975
          %979 = vrot.lane.b32.xlu0 %v973, 72
          %v980 = vpop.permute.xlu0 %979
          %v982 = vsel %vm692, %v976, %v980
          %983 = vset.pattern.permute.xlu0 22
          %984 = vperm.xlu0 %983, %v578
          %v985 = vpop.permute.xlu0 %984
          %v987 = vmul.f32 %v985, %v619
          %v988 = vmul.f32 %v985, %v632
          %989 = vset.pattern.permute.xlu0 23
          %990 = vperm.xlu0 %989, %v578
          %v991 = vpop.permute.xlu0 %990
          %v993 = vmul.f32 %v991, %v619
          %v994 = vmul.f32 %v991, %v632
          %996 = vrot.lane.b32.xlu0 %v993, 120
          %v997 = vpop.permute.xlu0 %996
          %v999 = vadd.f32 %v987, %v997
          %1001 = vrot.lane.b32.xlu0 %v994, 120
          %v1002 = vpop.permute.xlu0 %1001
          %v1004 = vadd.f32 %v988, %v1002
          %1006 = vrot.lane.b32.xlu0 %v999, 64
          %v1007 = vpop.permute.xlu0 %1006
          %1010 = vrot.lane.b32.xlu0 %v1004, 72
          %v1011 = vpop.permute.xlu0 %1010
          %v1013 = vsel %vm692, %v1007, %v1011
          %1015 = vrot.lane.b32.xlu0 %v951, 16
          %v1016 = vpop.permute.xlu0 %1015
          %1019 = vrot.lane.b32.xlu0 %v982, 32
          %v1020 = vpop.permute.xlu0 %1019
          %1023 = vrot.lane.b32.xlu0 %v1013, 48
          %v1024 = vpop.permute.xlu0 %1023
          %v1026 = vsel %vm883, %v920, %v1016
          %v1027 = vsel %vm572, %v1026, %v1020
          %v1028 = vsel %vm886, %v1027, %v1024
          %v1029 = vmul.f32 %v1028, 0.5
          %1030 = vst.msk [vmem:[%s451] sm:$0xff] %vm494, %v1029
          %1031 = vset.pattern.permute.xlu0 24
          %1032 = vperm.xlu0 %1031, %v578
          %v1033 = vpop.permute.xlu0 %1032
          %v1035 = vmul.f32 %v1033, %v577
          %1036 = vset.pattern.permute.xlu0 25
          %1037 = vperm.xlu0 %1036, %v578
          %v1038 = vpop.permute.xlu0 %1037
          %v1040 = vmul.f32 %v1038, %v577
          %1042 = vrot.lane.b32.xlu0 %v1040, 112
          %v1043 = vpop.permute.xlu0 %1042
          %v1045 = vadd.f32 %v1035, %v1043
          %1046 = vset.pattern.permute.xlu0 26
          %1047 = vperm.xlu0 %1046, %v578
          %v1048 = vpop.permute.xlu0 %1047
          %v1050 = vmul.f32 %v1048, %v577
          %1051 = vset.pattern.permute.xlu0 27
          %1052 = vperm.xlu0 %1051, %v578
          %v1053 = vpop.permute.xlu0 %1052
          %v1055 = vmul.f32 %v1053, %v577
          %1057 = vrot.lane.b32.xlu0 %v1055, 112
          %v1058 = vpop.permute.xlu0 %1057
          %v1060 = vadd.f32 %v1050, %v1058
          %1061 = vset.pattern.permute.xlu0 28
          %1062 = vperm.xlu0 %1061, %v578
          %v1063 = vpop.permute.xlu0 %1062
          %v1065 = vmul.f32 %v1063, %v577
          %1066 = vset.pattern.permute.xlu0 29
          %1067 = vperm.xlu0 %1066, %v578
          %v1068 = vpop.permute.xlu0 %1067
          %v1070 = vmul.f32 %v1068, %v577
          %1072 = vrot.lane.b32.xlu0 %v1070, 112
          %v1073 = vpop.permute.xlu0 %1072
          %v1075 = vadd.f32 %v1065, %v1073
          %1076 = vset.pattern.permute.xlu0 30
          %1077 = vperm.xlu0 %1076, %v578
          %v1078 = vpop.permute.xlu0 %1077
          %v1080 = vmul.f32 %v1078, %v577
          %1081 = vset.pattern.permute.xlu0 31
          %1082 = vperm.xlu0 %1081, %v578
          %v1083 = vpop.permute.xlu0 %1082
          %v1085 = vmul.f32 %v1083, %v577
          %1087 = vrot.lane.b32.xlu0 %v1085, 112
          %v1088 = vpop.permute.xlu0 %1087
          %v1090 = vadd.f32 %v1080, %v1088
          %1092 = vrot.lane.b32.xlu0 %v1045, 32
          %v1093 = vpop.permute.xlu0 %1092
          %1096 = vrot.lane.b32.xlu0 %v1060, 48
          %v1097 = vpop.permute.xlu0 %1096
          %1100 = vrot.lane.b32.xlu0 %v1075, 64
          %v1101 = vpop.permute.xlu0 %1100
          %1104 = vrot.lane.b32.xlu0 %v1090, 80
          %v1105 = vpop.permute.xlu0 %1104
          %v1107 = vsel %vm883, %v1093, %v1097
          %v1108 = vsel %vm572, %v1107, %v1101
          %v1109 = vsel %vm886, %v1108, %v1105
          %v1110 = vmul.f32 %v1109, 0.5
          %1111 = vst.msk [vmem:[%s458] sm:$0xff] %vm494, %v1110
        $region68: #{tpu_custom_call.1} parent=43 // pred_fallthru
          _
        %s1112 = sand.u32 %s220, 1
        %s1113 = scalar_lea.sflag [#allocation5], %s1112
        %s1114 = sand.u32 %s220, 1
        %s1115 = smul.addr %s1114, 8
        %s1116 = scalar_lea.vmem [#allocation11], %s1115
        %s1117 = sand.u32 %s31, 1
        %s1118 = scalar_lea.sflag [#allocation13], %s1117
        %s1119 = sand.u32 %s248, 1
        %s1120 = smul.addr %s1119, 8
        %s1121 = scalar_lea.vmem [#allocation12], %s1120
        %s1122 = sand.u32 %s31, 1
        %s1123 = scalar_lea.sflag [#allocation13], %s1122
        %s1124 = sand.u32 %s276, 1
        %s1125 = smul.addr %s1124, 8
        %s1126 = scalar_lea.vmem [#allocation14], %s1125
        // Predicated region
        $region69: #{tpu_custom_call.1} parent=43 // pred_check
          %p1127 = pneg %p230
        $region70: #{tpu_custom_call.1} parent=43 // pred_check_branch
          %1129 = sbr.rel (%p1127) target = $region72
        $region71: #{tpu_custom_call.1} parent=43 // pred_region
          %s1131 = ssub.s32 128, 128
          %1132 = vsyncadd %s1113, %s1131
          %s1133 = sadd.s32 %s37, %s36
          %s1134 = smul.addr %s1133, 128
          %s1135 = scalar_lea.hbm %s6, %s1134
          %s1137 = sshll.u32 %s1116, 4
          %s1138 = int_to_ptr.vmem [resolvable:$true] %s1137
          %1140 = dma.vmem_to_hbm [thread:$0]  %s1138, 128, %s1135, %s1113
        $region72: #{tpu_custom_call.1} parent=43 // pred_fallthru
          _
        // Predicated region
        $region73: #{tpu_custom_call.1} parent=43 // pred_check
          %p1141 = pneg %p258
        $region74: #{tpu_custom_call.1} parent=43 // pred_check_branch
          %1143 = sbr.rel (%p1141) target = $region76
        $region75: #{tpu_custom_call.1} parent=43 // pred_region
          %s1145 = ssub.s32 128, 128
          %1146 = vsyncadd %s1118, %s1145
          %s1147 = sadd.s32 %s37, %s36
          %s1148 = smul.addr %s1147, 128
          %s1149 = scalar_lea.hbm %s7, %s1148
          %s1151 = sshll.u32 %s1121, 4
          %s1152 = int_to_ptr.vmem [resolvable:$true] %s1151
          %1154 = dma.vmem_to_hbm [thread:$0]  %s1152, 128, %s1149, %s1118
        $region76: #{tpu_custom_call.1} parent=43 // pred_fallthru
          _
        // Predicated region
        $region77: #{tpu_custom_call.1} parent=43 // pred_check
          %p1155 = pneg %p286
        $region78: #{tpu_custom_call.1} parent=43 // pred_check_branch
          %1157 = sbr.rel (%p1155) target = $region80
        $region79: #{tpu_custom_call.1} parent=43 // pred_region
          %s1159 = ssub.s32 128, 128
          %1160 = vsyncadd %s1123, %s1159
          %s1161 = sadd.s32 %s37, %s36
          %s1162 = smul.addr %s1161, 128
          %s1163 = scalar_lea.hbm %s8, %s1162
          %s1165 = sshll.u32 %s1126, 4
          %s1166 = int_to_ptr.vmem [resolvable:$true] %s1165
          %1168 = dma.vmem_to_hbm [thread:$0]  %s1166, 128, %s1163, %s1123
        $region80: #{tpu_custom_call.1} parent=43 // pred_fallthru
          _
      $region44: #{tpu_custom_call.1} parent=5 // pred_fallthru
        _
      %p1169 = scmp.le.s32.totalorder 2, %s26
      // Predicated region
      $region81: #{tpu_custom_call.1} parent=5 // pred_check
        %p1170 = pneg %p1169
      $region82: #{tpu_custom_call.1} parent=5 // pred_check_branch
        %1172 = sbr.rel (%p1170) target = $region84
      $region83: #{tpu_custom_call.1} parent=5 // pred_region
        %s1173 = ssub.s32 %s26, 2
        // Predicated region
        $region85: #{tpu_custom_call.1} parent=83 // pred_check
          %p1174 = pneg %p236
        $region86: #{tpu_custom_call.1} parent=83 // pred_check_branch
          %1176 = sbr.rel (%p1174) target = $region88
        $region87: #{tpu_custom_call.1} parent=83 // pred_region
          %s1177 = sand.u32 %s221, 1
          %s1178 = scalar_lea.sflag [#allocation5], %s1177
          %s1179 = sand.u32 %s221, 1
          %s1180 = smul.addr %s1179, 8
          %s1181 = scalar_lea.vmem [#allocation11], %s1180
          %1182 = dma.done %s1178, 128
        $region88: #{tpu_custom_call.1} parent=83 // pred_fallthru
          _
        // Predicated region
        $region89: #{tpu_custom_call.1} parent=83 // pred_check
          %p1183 = pneg %p264
        $region90: #{tpu_custom_call.1} parent=83 // pred_check_branch
          %1185 = sbr.rel (%p1183) target = $region92
        $region91: #{tpu_custom_call.1} parent=83 // pred_region
          %s1186 = sand.u32 %s32, 1
          %s1187 = scalar_lea.sflag [#allocation13], %s1186
          %s1188 = sand.u32 %s249, 1
          %s1189 = smul.addr %s1188, 8
          %s1190 = scalar_lea.vmem [#allocation12], %s1189
          %1191 = dma.done %s1187, 128
        $region92: #{tpu_custom_call.1} parent=83 // pred_fallthru
          _
        // Predicated region
        $region93: #{tpu_custom_call.1} parent=83 // pred_check
          %p1192 = pneg %p292
        $region94: #{tpu_custom_call.1} parent=83 // pred_check_branch
          %1194 = sbr.rel (%p1192) target = $region96
        $region95: #{tpu_custom_call.1} parent=83 // pred_region
          %s1195 = sand.u32 %s32, 1
          %s1196 = scalar_lea.sflag [#allocation13], %s1195
          %s1197 = sand.u32 %s277, 1
          %s1198 = smul.addr %s1197, 8
          %s1199 = scalar_lea.vmem [#allocation14], %s1198
          %1200 = dma.done %s1196, 128
        $region96: #{tpu_custom_call.1} parent=83 // pred_fallthru
          _
      $region84: #{tpu_custom_call.1} parent=5 // pred_fallthru
        _
    $region6: #{tpu_custom_call.1} parent=1 // loop_footer
      %s30 = sadd.s32 1, %s26
    $region7: #{tpu_custom_call.1} parent=1 // loop_footer_branch
      %25 = sbr.rel target = $region3
    $region8: #{tpu_custom_call.1} parent=1 // loop_exit
      _
    %1201 = vsyncpa [#allocation4], 1
    %s1202 = scalar_lea.sflag [#allocation4], 1
    %1203 = vsyncpa %s1202, 1
    %1204 = vsyncpa [#allocation7], 1
    %1205 = vsyncpa [#allocation10], 1
    %1206 = vsyncpa [#allocation5], 1
    %s1207 = scalar_lea.sflag [#allocation5], 1
    %1208 = vsyncpa %s1207, 1
    %1209 = vsyncpa [#allocation13], 1
    %s1210 = scalar_lea.sflag [#allocation13], 1
    %1211 = vsyncpa %s1210, 1

</llo_original>
